<compile_context>
chip_gen: v7x
topology: tpu7x:2x2x1
jax: 0.10.0
libtpu: 0.0.40
codegen_flags: <defaults>
</compile_context>

<pallas_src>
import functools

import jax
import jax.numpy as jnp
from jax.experimental import pallas as pl
from jax.experimental.pallas import tpu as pltpu

BN_EPS = 1e-5
LANE = 128
PAD_GRAN = 256                 # node-count padding granularity (not tile-coupled)
MAX_TILE = 2048                # widest streaming tile considered
ADJ_TILE_BYTES = 4 << 20       # per-buffer budget for a streamed adjacency block
XW_RESIDENT_BYTES = 16 << 20   # keep xw slab resident if 2x slab fits this
VMEM_CAP_BYTES = 56 << 20      # stay under v7x's 64 MiB physical VMEM
NEG_BIG = -1e30


def _round_up(x, m):
    return (x + m - 1) // m * m


def _pad2d(a, rows, cols):
    r, c = a.shape
    if r == rows and c == cols:
        return a
    return jnp.pad(a, ((0, rows - r), (0, cols - c)))


def padded_num_nodes(n):
    return _round_up(n, PAD_GRAN)


def prepare_adjacency(adj_norm, n_pad, compute_dtype=jnp.bfloat16):
    """Pad to (n_pad, n_pad) and cast ONCE, outside the forward jit."""
    return _pad2d(adj_norm, n_pad, n_pad).astype(compute_dtype)


def _choose_tiles(n_pad, adj_itemsize):
    """Pick (tm, tk): divisors of n_pad, 128-aligned, within a VMEM budget."""
    cands = sorted(
        (t for t in range(LANE, min(n_pad, MAX_TILE) + 1, LANE)
         if n_pad % t == 0),
        reverse=True)
    tk = cands[0]                                  # widest reduction tile
    tm = None
    # Prefer >=2 row tiles so both v7x TensorCores do work (parallel axis).
    for t in cands:
        if n_pad // t >= 2 and t * tk * adj_itemsize <= ADJ_TILE_BYTES:
            tm = t
            break
    if tm is None:
        for t in cands:
            if t * tk * adj_itemsize <= ADJ_TILE_BYTES:
                tm = t
                break
    if tm is None:
        tm = cands[-1]
    while tm * tk * adj_itemsize > ADJ_TILE_BYTES and tk > cands[-1]:
        tk = max(c for c in cands if c < tk)
    return tm, tk


# ---------------------------------------------------------------------------
# Kernels
# ---------------------------------------------------------------------------

def _xw_kernel(x_ref, w_ref, o_ref):
    """xw = x @ W'  (BN scale already folded into W'); f32 MXU accumulation."""
    o_ref[...] = jnp.dot(
        x_ref[...], w_ref[...], preferred_element_type=jnp.float32
    ).astype(o_ref.dtype)


def _propagate_kernel(*refs, epilogue, num_valid_cols, tk, xw_resident,
                      fuse_next):
    """acc[i] = sum_k adj[i,k] @ xw[k]; fused bias/ReLU(/next-lin)/log-softmax."""
    if fuse_next:
        adj_ref, xw_ref, b_ref, w_next_ref, o_ref, acc_ref = refs
    else:
        adj_ref, xw_ref, b_ref, o_ref, acc_ref = refs
        w_next_ref = None
    k = pl.program_id(1)

    @pl.when(k == 0)
    def _():
        acc_ref[...] = jnp.zeros_like(acc_ref)

    if xw_resident:
        # xw slab is VMEM-resident for the whole call; slice the k-th chunk.
        start = pl.multiple_of(k * tk, LANE)
        xw_blk = xw_ref[pl.ds(start, tk), :]
    else:
        xw_blk = xw_ref[...]

    acc_ref[...] += jnp.dot(adj_ref[...], xw_blk,
                            preferred_element_type=jnp.float32)

    @pl.when(k == pl.num_programs(1) - 1)
    def _():
        h = acc_ref[...] + b_ref[...]                 # f32 epilogue
        if epilogue == "relu":
            h = jnp.maximum(h, 0.0)
            if fuse_next:
                # Next layer's lin(): write xw_{i+1} directly (no HBM h trip).
                h = jnp.dot(h.astype(w_next_ref.dtype), w_next_ref[...],
                            preferred_element_type=jnp.float32)
        elif epilogue == "log_softmax":
            # Mask padded class lanes so they don't contribute to max / sum.
            lane = jax.lax.broadcasted_iota(jnp.int32, h.shape, 1)
            h = jnp.where(lane < num_valid_cols, h, NEG_BIG)
            m = jnp.max(h, axis=-1, keepdims=True)
            shifted = h - m
            lse = jnp.log(jnp.sum(jnp.exp(shifted), axis=-1, keepdims=True))
            h = shifted - lse
        # epilogue == "none": bias only (return_embeds path)
        o_ref[...] = h.astype(o_ref.dtype)


# ---------------------------------------------------------------------------
# pallas_call wrappers
# ---------------------------------------------------------------------------

def _linear(x, w, *, tm, compute_dtype):
    """Row-tiled x @ W' (layer 0 only; later layers fuse lin into propagate)."""
    n_pad, fin = x.shape
    fout = w.shape[1]
    cd_item = jnp.dtype(compute_dtype).itemsize
    need = (2 * tm * fin + 2 * fin * fout + 2 * tm * fout) * cd_item
    vmem_limit = min(max(int(need * 1.3) + (2 << 20), 32 << 20), VMEM_CAP_BYTES)
    return pl.pallas_call(
        _xw_kernel,
        out_shape=jax.ShapeDtypeStruct((n_pad, fout), compute_dtype),
        grid_spec=pltpu.PrefetchScalarGridSpec(
            num_scalar_prefetch=0,
            grid=(n_pad // tm,),
            in_specs=[
                pl.BlockSpec((tm, fin), lambda i: (i, 0)),
                pl.BlockSpec((fin, fout), lambda i: (0, 0)),
            ],
            out_specs=pl.BlockSpec((tm, fout), lambda i: (i, 0)),
        ),
        compiler_params=pltpu.CompilerParams(
            dimension_semantics=("parallel",),
            vmem_limit_bytes=vmem_limit),
    )(x.astype(compute_dtype), w.astype(compute_dtype))


def _propagate(adj, xw, b, w_next=None, *, tm, tk, epilogue, num_valid_cols,
               out_dtype):
    """Tiled adj @ xw with resident xw slab, f32 accumulator, fused epilogue."""
    n_pad = adj.shape[0]
    fout_in = xw.shape[1]
    fuse_next = w_next is not None
    fout_out = w_next.shape[1] if fuse_next else fout_in

    adj_item = jnp.dtype(adj.dtype).itemsize
    cd_item = jnp.dtype(xw.dtype).itemsize
    out_item = jnp.dtype(out_dtype).itemsize

    xw_bytes = n_pad * fout_in * cd_item
    xw_resident = 2 * xw_bytes <= XW_RESIDENT_BYTES   # 2x: conservative (buffers)

    kernel = functools.partial(
        _propagate_kernel, epilogue=epilogue, num_valid_cols=num_valid_cols,
        tk=tk, xw_resident=xw_resident, fuse_next=fuse_next)

    in_specs = [pl.BlockSpec((tm, tk), lambda i, k: (i, k))]     # adj stream
    if xw_resident:
        # Full slab, constant block index -> fetched once, resident in VMEM.
        in_specs.append(pl.BlockSpec((n_pad, fout_in), lambda i, k: (0, 0)))
    else:
        # Fallback for very large graphs: stream xw per reduction step.
        in_specs.append(pl.BlockSpec((tk, fout_in), lambda i, k: (k, 0)))
    in_specs.append(pl.BlockSpec((1, fout_in), lambda i, k: (0, 0)))  # bias f32
    args = [adj, xw, b]
    if fuse_next:
        in_specs.append(pl.BlockSpec((fout_in, fout_out), lambda i, k: (0, 0)))
        args.append(w_next)

    # Right-size the scoped-VMEM limit to actual usage (v7x-safe cap).
    need = 2 * tm * tk * adj_item                                   # adj bufs
    need += 2 * xw_bytes if xw_resident else 2 * tk * fout_in * cd_item
    need += 2 * tm * fout_out * out_item                            # out bufs
    need += tm * fout_in * 4                                        # f32 acc
    need += 2 * 8 * fout_in * 4                                     # bias
    if fuse_next:
        need += 2 * fout_in * fout_out * cd_item                    # W'_{i+1}
    vmem_limit = min(max(int(need * 1.3) + (2 << 20), 32 << 20), VMEM_CAP_BYTES)

    return pl.pallas_call(
        kernel,
        out_shape=jax.ShapeDtypeStruct((n_pad, fout_out), out_dtype),
        grid_spec=pltpu.PrefetchScalarGridSpec(
            num_scalar_prefetch=0,
            grid=(n_pad // tm, n_pad // tk),
            in_specs=in_specs,
            out_specs=pl.BlockSpec((tm, fout_out), lambda i, k: (i, 0)),
            scratch_shapes=[pltpu.VMEM((tm, fout_in), jnp.float32)],
        ),
        compiler_params=pltpu.CompilerParams(
            dimension_semantics=("parallel", "arbitrary"),
            vmem_limit_bytes=vmem_limit),
    )(*args)


# ---------------------------------------------------------------------------
# Parameter handling / forward
# ---------------------------------------------------------------------------

def _fold_bn(w, b, gamma, beta, mean, var):
    """Fold eval-mode BatchNorm1d into the conv weight/bias (f32)."""
    s = gamma * jax.lax.rsqrt(var + BN_EPS)          # (1, fout)
    return w * s, b * s + beta - mean * s


def init_gcn_params(key, input_dim, hidden_dim, output_dim, num_layers):
    """Deterministic Glorot-uniform weights, zero biases, perturbed BN stats."""
    dims = [input_dim] + [hidden_dim] * (num_layers - 1) + [output_dim]
    params = {"convs": [], "bns": []}
    for i in range(num_layers):
        key, wkey = jax.random.split(key)
        fan_in, fan_out = dims[i], dims[i + 1]
        limit = jnp.sqrt(6.0 / (fan_in + fan_out))
        w = jax.random.uniform(wkey, (fan_in, fan_out), jnp.float32, -limit, limit)
        b = jnp.zeros((1, fan_out), jnp.float32)
        params["convs"].append((w, b))
    for _ in range(num_layers - 1):
        key, k1, k2, k3, k4 = jax.random.split(key, 5)
        gamma = 1.0 + 0.1 * jax.random.normal(k1, (1, hidden_dim), jnp.float32)
        beta = 0.1 * jax.random.normal(k2, (1, hidden_dim), jnp.float32)
        mean = 0.1 * jax.random.normal(k3, (1, hidden_dim), jnp.float32)
        var = 1.0 + 0.2 * jax.random.uniform(k4, (1, hidden_dim), jnp.float32)
        params["bns"].append((gamma, beta, mean, var))
    return params


@functools.partial(jax.jit, static_argnames=("return_embeds", "compute_dtype"))
def gcn_forward(params, x, adj_p, return_embeds=False,
                compute_dtype=jnp.bfloat16):
    """adj_p: pre-padded (n_pad, n_pad) adjacency in compute_dtype
    (see prepare_adjacency — hoisted out of the per-call jit)."""
    num_layers = len(params["convs"])
    n, fin = x.shape
    n_pad = adj_p.shape[0]
    out_dim = params["convs"][-1][0].shape[1]

    tm, tk = _choose_tiles(n_pad, jnp.dtype(adj_p.dtype).itemsize)

    # Fold eval-mode BN into hidden-layer (W, b); zero-pad to 128 lanes.
    ws, bs, fouts = [], [], []
    for i in range(num_layers):
        w, b = params["convs"][i]
        if i < num_layers - 1:
            gamma, beta, mean, var = params["bns"][i]
            w, b = _fold_bn(w, b, gamma, beta, mean, var)
        fout = w.shape[1]
        fin_pad = _round_up(w.shape[0], LANE)
        fout_pad = _round_up(fout, LANE)
        ws.append(_pad2d(w, fin_pad, fout_pad).astype(compute_dtype))
        bs.append(_pad2d(b, 1, fout_pad).astype(jnp.float32))
        fouts.append(fout)

    # Layer 0 lin(): xw_0 = x @ W'_0 computed once (row-tiled).
    x_p = _pad2d(x, n_pad, ws[0].shape[0])
    xw = _linear(x_p, ws[0], tm=tm, compute_dtype=compute_dtype)

    h = None
    for i in range(num_layers):
        if i < num_layers - 1:
            # propagate + (folded-BN) bias + ReLU + next layer's lin(), fused.
            xw = _propagate(adj_p, xw, bs[i], w_next=ws[i + 1], tm=tm, tk=tk,
                            epilogue="relu", num_valid_cols=fouts[i],
                            out_dtype=compute_dtype)
        else:
            epilogue = "none" if return_embeds else "log_softmax"
            h = _propagate(adj_p, xw, bs[i], tm=tm, tk=tk, epilogue=epilogue,
                           num_valid_cols=fouts[i], out_dtype=jnp.float32)

    return h[:n, :out_dim]


def normalized_adjacency(adj, n):
    """D^-1/2 (A + I) D^-1/2 — plain-JAX glue (matches PyG gcn_norm)."""
    a = adj + jnp.eye(n, dtype=jnp.float32)
    deg = jnp.sum(a, axis=1)
    d_inv_sqrt = 1.0 / jnp.sqrt(jnp.maximum(deg, 1e-12))
    return a * d_inv_sqrt[:, None] * d_inv_sqrt[None, :]


# ---------------------------------------------------------------------------
# References / self-test
# ---------------------------------------------------------------------------

def _ref_forward_f32(params, x, adj_norm):
    """Spec-faithful f32 reference (unfolded BN, jax.nn.log_softmax)."""
    num_layers = len(params["convs"])
    h = x
    for i in range(num_layers - 1):
        w, b = params["convs"][i]
        gamma, beta, mean, var = params["bns"][i]
        h = adj_norm @ (h @ w) + b
        h = (h - mean) / jnp.sqrt(var + BN_EPS) * gamma + beta
        h = jnp.maximum(h, 0.0)
    w, b = params["convs"][-1]
    h = adj_norm @ (h @ w) + b
    return jax.nn.log_softmax(h, axis=1)


def _ref_forward_mixed(params, x, adj_norm, dtype):
    """Mirror of the Pallas pipeline (folded BN, dtype matmuls, f32 acc)."""
    num_layers = len(params["convs"])
    h = x
    adj_c = adj_norm.astype(dtype)
    for i in range(num_layers):
        w, b = params["convs"][i]
        if i < num_layers - 1:
            gamma, beta, mean, var = params["bns"][i]
            w, b = _fold_bn(w, b, gamma, beta, mean, var)
        xw = jnp.dot(h.astype(dtype), w.astype(dtype),
                     preferred_element_type=jnp.float32).astype(dtype)
        hh = jnp.dot(adj_c, xw, preferred_element_type=jnp.float32) + b
        if i < num_layers - 1:
            h = jnp.maximum(hh, 0.0).astype(dtype)
        else:
            h = jax.nn.log_softmax(hh, axis=1)
    return h


if __name__ == "__main__":
    key = jax.random.PRNGKey(0)
    k_x, k_adj, k_par = jax.random.split(key, 3)

    # Small synthetic graph: 32 nodes, 16 input feats, hidden 32, 8 classes, 3 layers.
    num_nodes, input_dim, hidden_dim, output_dim, num_layers = 32, 16, 32, 8, 3

    x = jax.random.normal(k_x, (num_nodes, input_dim), jnp.float32)
    rand = jax.random.uniform(k_adj, (num_nodes, num_nodes))
    adj = (rand < 0.15).astype(jnp.float32)
    adj = jnp.maximum(adj, adj.T) * (1.0 - jnp.eye(num_nodes, dtype=jnp.float32))
    adj_norm = normalized_adjacency(adj, num_nodes)

    params = init_gcn_params(k_par, input_dim, hidden_dim, output_dim, num_layers)

    # Pad/cast the adjacency once, outside the forward (hoisted per review).
    n_pad = padded_num_nodes(num_nodes)
    adj_p_f32 = prepare_adjacency(adj_norm, n_pad, jnp.float32)
    adj_p_bf16 = prepare_adjacency(adj_norm, n_pad, jnp.bfloat16)

    # --- f32 path: tight check against the spec-faithful reference ---------
    out_f32 = gcn_forward(params, x, adj_p_f32, compute_dtype=jnp.float32)
    out_f32 = jax.block_until_ready(out_f32)
    ref_f32 = _ref_forward_f32(params, x, adj_norm)
    assert out_f32.shape == (num_nodes, output_dim)
    assert jnp.allclose(out_f32, ref_f32, atol=1e-4, rtol=1e-4)

    # --- bf16 path (default / fast): check against mirrored bf16 reference --
    out_bf16 = gcn_forward(params, x, adj_p_bf16)      # compute_dtype=bfloat16
    out_bf16 = jax.block_until_ready(out_bf16)
    ref_bf16 = _ref_forward_mixed(params, x, adj_norm, jnp.bfloat16)
    assert out_bf16.shape == (num_nodes, output_dim)
    assert jnp.allclose(out_bf16, ref_bf16, atol=1e-2, rtol=1e-2)

    # log_softmax rows should exp-sum to 1
    assert jnp.allclose(jnp.sum(jnp.exp(out_f32), axis=1), 1.0, atol=1e-4)
    assert jnp.allclose(jnp.sum(jnp.exp(out_bf16), axis=1), 1.0, atol=1e-3)

    print("KERNEL_OK")
</pallas_src>

<mosaic_0001>
module attributes {stable_mosaic.version = 11 : i64} {
  func.func @_xw_kernel(%arg0: i32, %arg1: memref<128x128xf32, #tpu.memory_space<vmem>>, %arg2: memref<128x128xf32, #tpu.memory_space<vmem>>, %arg3: memref<128x128xf32, #tpu.memory_space<vmem>>) attributes {dimension_semantics = [#tpu.dimension_semantics<parallel>], iteration_bounds = array<i64: 2>, scalar_prefetch = 0 : i64, scratch_operands = 0 : i64, tpu.core_type = #tpu.core_type<tc>, window_params = [{transform_indices = @transform_0, window_bounds = array<i64: 128, 128>}, {pipeline_mode = #tpu.pipeline_mode<synchronous>, transform_indices = @transform_1, window_bounds = array<i64: 128, 128>}, {transform_indices = @transform_2, window_bounds = array<i64: 128, 128>}]} {
    %c0 = arith.constant 0 : index
    %c0_0 = arith.constant 0 : index
    %0 = vector.load %arg1[%c0, %c0_0] : memref<128x128xf32, #tpu.memory_space<vmem>>, vector<128x128xf32>
    %c0_1 = arith.constant 0 : index
    %c0_2 = arith.constant 0 : index
    %1 = vector.load %arg2[%c0_1, %c0_2] : memref<128x128xf32, #tpu.memory_space<vmem>>, vector<128x128xf32>
    %cst = arith.constant dense<0.000000e+00> : vector<128x128xf32>
    %2 = tpu.matmul %0, %1, %cst {dimension_numbers = #tpu.dot_dimension_numbers<[1], [0], [0], [1], [0, 0, 1, 1], [], []>} : vector<128x128xf32>, vector<128x128xf32>, vector<128x128xf32> -> vector<128x128xf32>
    %c0_3 = arith.constant 0 : index
    %c0_4 = arith.constant 0 : index
    %3 = vector.load %arg3[%c0_3, %c0_4] : memref<128x128xf32, #tpu.memory_space<vmem>>, vector<128x128xf32>
    tpu.vector_store %arg3[%c0_3, %c0_4], %2 {strides = array<i32>} : memref<128x128xf32, #tpu.memory_space<vmem>>, vector<128x128xf32>,
    return
  }
  func.func @transform_0(%arg0: i32) -> (i32, i32) {
    %c0_i32 = arith.constant 0 : i32
    %c0_i32_0 = arith.constant 0 : i32
    return %arg0, %c0_i32 : i32, i32
  }
  func.func @transform_1(%arg0: i32) -> (i32, i32) {
    %c0_i32 = arith.constant 0 : i32
    %c0_i32_0 = arith.constant 0 : i32
    %c0_i32_1 = arith.constant 0 : i32
    return %c0_i32, %c0_i32_0 : i32, i32
  }
  func.func @transform_2(%arg0: i32) -> (i32, i32) {
    %c0_i32 = arith.constant 0 : i32
    %c0_i32_0 = arith.constant 0 : i32
    return %arg0, %c0_i32 : i32, i32
  }
}

module attributes {stable_mosaic.version = 11 : i64} {
  func.func @_propagate_kernel(%arg0: i32, %arg1: i32, %arg2: memref<128x256xf32, #tpu.memory_space<vmem>>, %arg3: memref<256x128xf32, #tpu.memory_space<vmem>>, %arg4: memref<1x128xf32, #tpu.memory_space<vmem>>, %arg5: memref<128x128xf32, #tpu.memory_space<vmem>>, %arg6: memref<128x128xf32, #tpu.memory_space<vmem>>, %arg7: memref<128x128xf32, #tpu.memory_space<vmem>>) attributes {dimension_semantics = [#tpu.dimension_semantics<parallel>, #tpu.dimension_semantics<arbitrary>], iteration_bounds = array<i64: 2, 1>, scalar_prefetch = 0 : i64, scratch_operands = 1 : i64, tpu.core_type = #tpu.core_type<tc>, window_params = [{transform_indices = @transform_0, window_bounds = array<i64: 128, 256>}, {pipeline_mode = #tpu.pipeline_mode<synchronous>, transform_indices = @transform_1, window_bounds = array<i64: 256, 128>}, {pipeline_mode = #tpu.pipeline_mode<synchronous>, transform_indices = @transform_2, window_bounds = array<i64: 1, 128>}, {pipeline_mode = #tpu.pipeline_mode<synchronous>, transform_indices = @transform_3, window_bounds = array<i64: 128, 128>}, {transform_indices = @transform_4, window_bounds = array<i64: 128, 128>}]} {
    %c0_i32 = arith.constant 0 : i32
    %0 = arith.cmpi eq, %arg1, %c0_i32 : i32
    %1 = arith.extui %0 : i1 to i32
    %c0_i32_0 = arith.constant 0 : i32
    %2 = arith.cmpi ne, %1, %c0_i32_0 : i32
    scf.if %2 {
      %cst_9 = arith.constant 0.000000e+00 : f32
      %15 = vector.broadcast %cst_9 : f32 to vector<128x128xf32>
      %c0_10 = arith.constant 0 : index
      %c0_11 = arith.constant 0 : index
      %16 = vector.load %arg7[%c0_10, %c0_11] : memref<128x128xf32, #tpu.memory_space<vmem>>, vector<128x128xf32>
      tpu.vector_store %arg7[%c0_10, %c0_11], %15 {strides = array<i32>} : memref<128x128xf32, #tpu.memory_space<vmem>>, vector<128x128xf32>,
    } else {
    }
    %c256_i32 = arith.constant 256 : i32
    %3 = arith.muli %arg1, %c256_i32 : i32
    %4 = tpu.assume_multiple %3, 128 : i32
    %5 = arith.index_cast %4 : i32 to index
    %c0 = arith.constant 0 : index
    %6 = vector.load %arg3[%5, %c0] : memref<256x128xf32, #tpu.memory_space<vmem>>, vector<256x128xf32>
    %c0_1 = arith.constant 0 : index
    %c0_2 = arith.constant 0 : index
    %7 = vector.load %arg7[%c0_1, %c0_2] : memref<128x128xf32, #tpu.memory_space<vmem>>, vector<128x128xf32>
    %c0_3 = arith.constant 0 : index
    %c0_4 = arith.constant 0 : index
    %8 = vector.load %arg2[%c0_3, %c0_4] : memref<128x256xf32, #tpu.memory_space<vmem>>, vector<128x256xf32>
    %cst = arith.constant dense<0.000000e+00> : vector<128x128xf32>
    %9 = tpu.matmul %8, %6, %cst {dimension_numbers = #tpu.dot_dimension_numbers<[1], [0], [0], [1], [0, 0, 1, 1], [], []>} : vector<128x256xf32>, vector<256x128xf32>, vector<128x128xf32> -> vector<128x128xf32>
    %10 = arith.addf %7, %9 : vector<128x128xf32>
    %c0_5 = arith.constant 0 : index
    %c0_6 = arith.constant 0 : index
    %11 = vector.load %arg7[%c0_5, %c0_6] : memref<128x128xf32, #tpu.memory_space<vmem>>, vector<128x128xf32>
    tpu.vector_store %arg7[%c0_5, %c0_6], %10 {strides = array<i32>} : memref<128x128xf32, #tpu.memory_space<vmem>>, vector<128x128xf32>,
    %c0_i32_7 = arith.constant 0 : i32
    %12 = arith.cmpi eq, %arg1, %c0_i32_7 : i32
    %13 = arith.extui %12 : i1 to i32
    %c0_i32_8 = arith.constant 0 : i32
    %14 = arith.cmpi ne, %13, %c0_i32_8 : i32
    scf.if %14 {
      %c0_9 = arith.constant 0 : index
      %c0_10 = arith.constant 0 : index
      %15 = vector.load %arg7[%c0_9, %c0_10] : memref<128x128xf32, #tpu.memory_space<vmem>>, vector<128x128xf32>
      %c0_11 = arith.constant 0 : index
      %c0_12 = arith.constant 0 : index
      %16 = vector.load %arg4[%c0_11, %c0_12] : memref<1x128xf32, #tpu.memory_space<vmem>>, vector<1x128xf32>
      %17 = vector.broadcast %16 : vector<1x128xf32> to vector<128x128xf32>
      %18 = arith.addf %15, %17 : vector<128x128xf32>
      %cst_13 = arith.constant 0.000000e+00 : f32
      %19 = vector.broadcast %cst_13 : f32 to vector<128x128xf32>
      %20 = arith.maximumf %18, %19 : vector<128x128xf32>
      %c0_14 = arith.constant 0 : index
      %c0_15 = arith.constant 0 : index
      %21 = vector.load %arg5[%c0_14, %c0_15] : memref<128x128xf32, #tpu.memory_space<vmem>>, vector<128x128xf32>
      %cst_16 = arith.constant dense<0.000000e+00> : vector<128x128xf32>
      %22 = tpu.matmul %20, %21, %cst_16 {dimension_numbers = #tpu.dot_dimension_numbers<[1], [0], [0], [1], [0, 0, 1, 1], [], []>} : vector<128x128xf32>, vector<128x128xf32>, vector<128x128xf32> -> vector<128x128xf32>
      %c0_17 = arith.constant 0 : index
      %c0_18 = arith.constant 0 : index
      %23 = vector.load %arg6[%c0_17, %c0_18] : memref<128x128xf32, #tpu.memory_space<vmem>>, vector<128x128xf32>
      tpu.vector_store %arg6[%c0_17, %c0_18], %22 {strides = array<i32>} : memref<128x128xf32, #tpu.memory_space<vmem>>, vector<128x128xf32>,
    } else {
    }
    return
  }
  func.func @transform_0(%arg0: i32, %arg1: i32) -> (i32, i32) {
    %c0_i32 = arith.constant 0 : i32
    return %arg0, %arg1 : i32, i32
  }
  func.func @transform_1(%arg0: i32, %arg1: i32) -> (i32, i32) {
    %c0_i32 = arith.constant 0 : i32
    %c0_i32_0 = arith.constant 0 : i32
    %c0_i32_1 = arith.constant 0 : i32
    return %c0_i32, %c0_i32_0 : i32, i32
  }
  func.func @transform_2(%arg0: i32, %arg1: i32) -> (i32, i32) {
    %c0_i32 = arith.constant 0 : i32
    %c0_i32_0 = arith.constant 0 : i32
    %c0_i32_1 = arith.constant 0 : i32
    return %c0_i32, %c0_i32_0 : i32, i32
  }
  func.func @transform_3(%arg0: i32, %arg1: i32) -> (i32, i32) {
    %c0_i32 = arith.constant 0 : i32
    %c0_i32_0 = arith.constant 0 : i32
    %c0_i32_1 = arith.constant 0 : i32
    return %c0_i32, %c0_i32_0 : i32, i32
  }
  func.func @transform_4(%arg0: i32, %arg1: i32) -> (i32, i32) {
    %c0_i32 = arith.constant 0 : i32
    %c0_i32_0 = arith.constant 0 : i32
    return %arg0, %c0_i32 : i32, i32
  }
}

module attributes {stable_mosaic.version = 11 : i64} {
  func.func @_propagate_kernel(%arg0: i32, %arg1: i32, %arg2: memref<128x256xf32, #tpu.memory_space<vmem>>, %arg3: memref<256x128xf32, #tpu.memory_space<vmem>>, %arg4: memref<1x128xf32, #tpu.memory_space<vmem>>, %arg5: memref<128x128xf32, #tpu.memory_space<vmem>>, %arg6: memref<128x128xf32, #tpu.memory_space<vmem>>) attributes {dimension_semantics = [#tpu.dimension_semantics<parallel>, #tpu.dimension_semantics<arbitrary>], iteration_bounds = array<i64: 2, 1>, scalar_prefetch = 0 : i64, scratch_operands = 1 : i64, tpu.core_type = #tpu.core_type<tc>, window_params = [{transform_indices = @transform_0, window_bounds = array<i64: 128, 256>}, {pipeline_mode = #tpu.pipeline_mode<synchronous>, transform_indices = @transform_1, window_bounds = array<i64: 256, 128>}, {pipeline_mode = #tpu.pipeline_mode<synchronous>, transform_indices = @transform_2, window_bounds = array<i64: 1, 128>}, {transform_indices = @transform_3, window_bounds = array<i64: 128, 128>}]} {
    %c0_i32 = arith.constant 0 : i32
    %0 = arith.cmpi eq, %arg1, %c0_i32 : i32
    %1 = arith.extui %0 : i1 to i32
    %c0_i32_0 = arith.constant 0 : i32
    %2 = arith.cmpi ne, %1, %c0_i32_0 : i32
    scf.if %2 {
      %cst_9 = arith.constant 0.000000e+00 : f32
      %15 = vector.broadcast %cst_9 : f32 to vector<128x128xf32>
      %c0_10 = arith.constant 0 : index
      %c0_11 = arith.constant 0 : index
      %16 = vector.load %arg6[%c0_10, %c0_11] : memref<128x128xf32, #tpu.memory_space<vmem>>, vector<128x128xf32>
      tpu.vector_store %arg6[%c0_10, %c0_11], %15 {strides = array<i32>} : memref<128x128xf32, #tpu.memory_space<vmem>>, vector<128x128xf32>,
    } else {
    }
    %c256_i32 = arith.constant 256 : i32
    %3 = arith.muli %arg1, %c256_i32 : i32
    %4 = tpu.assume_multiple %3, 128 : i32
    %5 = arith.index_cast %4 : i32 to index
    %c0 = arith.constant 0 : index
    %6 = vector.load %arg3[%5, %c0] : memref<256x128xf32, #tpu.memory_space<vmem>>, vector<256x128xf32>
    %c0_1 = arith.constant 0 : index
    %c0_2 = arith.constant 0 : index
    %7 = vector.load %arg6[%c0_1, %c0_2] : memref<128x128xf32, #tpu.memory_space<vmem>>, vector<128x128xf32>
    %c0_3 = arith.constant 0 : index
    %c0_4 = arith.constant 0 : index
    %8 = vector.load %arg2[%c0_3, %c0_4] : memref<128x256xf32, #tpu.memory_space<vmem>>, vector<128x256xf32>
    %cst = arith.constant dense<0.000000e+00> : vector<128x128xf32>
    %9 = tpu.matmul %8, %6, %cst {dimension_numbers = #tpu.dot_dimension_numbers<[1], [0], [0], [1], [0, 0, 1, 1], [], []>} : vector<128x256xf32>, vector<256x128xf32>, vector<128x128xf32> -> vector<128x128xf32>
    %10 = arith.addf %7, %9 : vector<128x128xf32>
    %c0_5 = arith.constant 0 : index
    %c0_6 = arith.constant 0 : index
    %11 = vector.load %arg6[%c0_5, %c0_6] : memref<128x128xf32, #tpu.memory_space<vmem>>, vector<128x128xf32>
    tpu.vector_store %arg6[%c0_5, %c0_6], %10 {strides = array<i32>} : memref<128x128xf32, #tpu.memory_space<vmem>>, vector<128x128xf32>,
    %c0_i32_7 = arith.constant 0 : i32
    %12 = arith.cmpi eq, %arg1, %c0_i32_7 : i32
    %13 = arith.extui %12 : i1 to i32
    %c0_i32_8 = arith.constant 0 : i32
    %14 = arith.cmpi ne, %13, %c0_i32_8 : i32
    scf.if %14 {
      %c0_9 = arith.constant 0 : index
      %c0_10 = arith.constant 0 : index
      %15 = vector.load %arg6[%c0_9, %c0_10] : memref<128x128xf32, #tpu.memory_space<vmem>>, vector<128x128xf32>
      %c0_11 = arith.constant 0 : index
      %c0_12 = arith.constant 0 : index
      %16 = vector.load %arg4[%c0_11, %c0_12] : memref<1x128xf32, #tpu.memory_space<vmem>>, vector<1x128xf32>
      %17 = vector.broadcast %16 : vector<1x128xf32> to vector<128x128xf32>
      %18 = arith.addf %15, %17 : vector<128x128xf32>
      %19 = tpu.iota {dimensions = array<i32: 1>} : vector<128x128xi32>
      %c8_i32 = arith.constant 8 : i32
      %20 = vector.broadcast %c8_i32 : i32 to vector<128x128xi32>
      %21 = arith.cmpi slt, %19, %20 : vector<128x128xi32>
      %cst_13 = arith.constant -1.000000e+30 : f32
      %22 = vector.broadcast %cst_13 : f32 to vector<128x128xf32>
      %23 = arith.select %21, %18, %22 : vector<128x128xi1>, vector<128x128xf32>
      %cst_14 = arith.constant dense<0xFF800000> : vector<128xf32>
      %24 = vector.multi_reduction <maximumf>, %23, %cst_14 [1] : vector<128x128xf32> to vector<128xf32>
      %25 = vector.shape_cast %24 : vector<128xf32> to vector<128x1xf32>
      %26 = vector.broadcast %25 : vector<128x1xf32> to vector<128x128xf32>
      %27 = arith.subf %23, %26 : vector<128x128xf32>
      %28 = math.exp %27 : vector<128x128xf32>
      %cst_15 = arith.constant dense<0.000000e+00> : vector<128xf32>
      %29 = vector.multi_reduction <add>, %28, %cst_15 [1] : vector<128x128xf32> to vector<128xf32>
      %30 = vector.shape_cast %29 : vector<128xf32> to vector<128x1xf32>
      %31 = math.log %30 : vector<128x1xf32>
      %32 = vector.broadcast %31 : vector<128x1xf32> to vector<128x128xf32>
      %33 = arith.subf %27, %32 : vector<128x128xf32>
      %c0_16 = arith.constant 0 : index
      %c0_17 = arith.constant 0 : index
      %34 = vector.load %arg5[%c0_16, %c0_17] : memref<128x128xf32, #tpu.memory_space<vmem>>, vector<128x128xf32>
      tpu.vector_store %arg5[%c0_16, %c0_17], %33 {strides = array<i32>} : memref<128x128xf32, #tpu.memory_space<vmem>>, vector<128x128xf32>,
    } else {
    }
    return
  }
  func.func @transform_0(%arg0: i32, %arg1: i32) -> (i32, i32) {
    %c0_i32 = arith.constant 0 : i32
    return %arg0, %arg1 : i32, i32
  }
  func.func @transform_1(%arg0: i32, %arg1: i32) -> (i32, i32) {
    %c0_i32 = arith.constant 0 : i32
    %c0_i32_0 = arith.constant 0 : i32
    %c0_i32_1 = arith.constant 0 : i32
    return %c0_i32, %c0_i32_0 : i32, i32
  }
  func.func @transform_2(%arg0: i32, %arg1: i32) -> (i32, i32) {
    %c0_i32 = arith.constant 0 : i32
    %c0_i32_0 = arith.constant 0 : i32
    %c0_i32_1 = arith.constant 0 : i32
    return %c0_i32, %c0_i32_0 : i32, i32
  }
  func.func @transform_3(%arg0: i32, %arg1: i32) -> (i32, i32) {
    %c0_i32 = arith.constant 0 : i32
    %c0_i32_0 = arith.constant 0 : i32
    return %arg0, %c0_i32 : i32, i32
  }
}

</mosaic_0001>

<llo_original>
// kernel: gcn_forward.4
$region0: #{gcn_forward.4}
  #allocation0 [shape = 'u32[]', space=smem, size = 0x4, offset = 0x4, fixed_abs, tag = 'smem constant byte address 0x4 - core index']
  #allocation1 [shape = 'u32[144,128]{1,0:T(1,128)}', space=vmem, size = 0x12000, scoped, tag = 'internal scratch']
  %s0 = inlined_call_operand.vmem [shape: f32[256,128], index: 0, kind: input, shape index: {}]
  %s1 = inlined_call_operand.vmem [shape: f32[128,128], index: 1, kind: input, shape index: {}]
  %s2 = inlined_call_operand.vmem [shape: f32[256,128], index: 2, kind: output, shape index: {}]
  %s3 = sld [smem:[#allocation0]]
  $region41: #{gcn_forward.4} parent=0
    _
  %s5 = ssub.s32 1, %s3
  %s6 = scalar_select 0, %s5, %s3
  loop: start=0, step=1, limit=4
  $region2: #{gcn_forward.4} parent=0 // loop_pre_header
    _
  $region3: #{gcn_forward.4} parent=0 // loop_header
    %s8 = sphi 0, %s12
    %p9 = scmp.ge.s32.totalorder %s8, 4
    %s18 = sphi 0, %s20
    %s21 = sphi 0, %s18
    %s22 = sphi 0, %s21
    %s38 = sphi 0, %s22
    %s42 = sphi 0, %s42
    %s44 = sphi 0, %s42
    %s45 = sphi 0, %s44
    %s59 = sphi 0, %s45
    %s65 = sphi 0, %s67
    %s68 = sphi 0, %s65
    %s69 = sphi 0, %s68
    %s85 = sphi 0, %s69
  $region4: #{gcn_forward.4} parent=0 // loop_header_branch
    %11 = sbr.rel (%p9) target = $region8
  $region5: #{gcn_forward.4} parent=0 // loop_body
    %s13 = ssub.s32 %s8, 1
    %s14 = ssub.s32 %s8, 2
    %s15 = sadd.s32 %s8, 1
    %s16 = ssub.s32 %s8, %s15
    %p17 = scmp.eq.s32.totalorder %s16, 0
    %s19 = sadd.s32 %s18, 1
    %s20 = scalar_select %p17, %s18, %s19
    %p23 = pneg %p17
    %p24 = scmp.eq.s32.totalorder %s8, 1
    %p25 = por %p23, %p24
    %p26 = scmp.ne.s32.totalorder %s18, %s21
    %p27 = scmp.eq.s32.totalorder %s8, 0
    %p28 = por %p26, %p27
    %p29 = scmp.ne.s32.totalorder %s18, %s21
    %p30 = scmp.eq.s32.totalorder %s13, 1
    %p31 = por %p29, %p30
    %p32 = scmp.ne.s32.totalorder %s21, %s22
    %p33 = scmp.eq.s32.totalorder %s13, 0
    %p34 = por %p32, %p33
    %p35 = scmp.ne.s32.totalorder %s21, %s22
    %p36 = scmp.eq.s32.totalorder %s14, 1
    %p37 = por %p35, %p36
    %p39 = scmp.ne.s32.totalorder %s22, %s38
    %p40 = scmp.eq.s32.totalorder %s14, 0
    %p41 = por %p39, %p40
    %s43 = sadd.s32 %s42, 1
    %p46 = scmp.eq.s32.totalorder %s8, 1
    %p47 = scmp.ne.s32.totalorder %s42, %s44
    %p48 = scmp.eq.s32.totalorder %s8, 0
    %p49 = por %p47, %p48
    %p50 = scmp.ne.s32.totalorder %s42, %s44
    %p51 = scmp.eq.s32.totalorder %s13, 1
    %p52 = por %p50, %p51
    %p53 = scmp.ne.s32.totalorder %s44, %s45
    %p54 = scmp.eq.s32.totalorder %s13, 0
    %p55 = por %p53, %p54
    %p56 = scmp.ne.s32.totalorder %s44, %s45
    %p57 = scmp.eq.s32.totalorder %s14, 1
    %p58 = por %p56, %p57
    %p60 = scmp.ne.s32.totalorder %s45, %s59
    %p61 = scmp.eq.s32.totalorder %s14, 0
    %p62 = por %p60, %p61
    %s63 = ssub.s32 %s8, %s15
    %p64 = scmp.eq.s32.totalorder %s63, 0
    %s66 = sadd.s32 %s65, 1
    %s67 = scalar_select %p64, %s65, %s66
    %p70 = pneg %p64
    %p71 = scmp.eq.s32.totalorder %s8, 1
    %p72 = por %p70, %p71
    %p73 = scmp.ne.s32.totalorder %s65, %s68
    %p74 = scmp.eq.s32.totalorder %s8, 0
    %p75 = por %p73, %p74
    %p76 = scmp.ne.s32.totalorder %s65, %s68
    %p77 = scmp.eq.s32.totalorder %s13, 1
    %p78 = por %p76, %p77
    %p79 = scmp.ne.s32.totalorder %s68, %s69
    %p80 = scmp.eq.s32.totalorder %s13, 0
    %p81 = por %p79, %p80
    %p82 = scmp.ne.s32.totalorder %s68, %s69
    %p83 = scmp.eq.s32.totalorder %s14, 1
    %p84 = por %p82, %p83
    %p86 = scmp.ne.s32.totalorder %s69, %s85
    %p87 = scmp.eq.s32.totalorder %s14, 0
    %p88 = por %p86, %p87
    %p89 = scmp.le.s32.totalorder 1, %s8
    %p90 = scmp.lt.s32.totalorder %s8, 3
    %p91 = pnand %p89, %p90
    %p92 = pneg %p91
    // Predicated region
    $region9: #{gcn_forward.4} parent=5 // pred_check
      _
    $region10: #{gcn_forward.4} parent=5 // pred_check_branch
      %94 = sbr.rel (%p91) target = $region12
    $region11: #{gcn_forward.4} parent=5 // pred_region
      %s95 = ssub.s32 %s8, 1
      // Predicated region
      $region13: #{gcn_forward.4} parent=11 // pred_check
        %p96 = pneg %p55
      $region14: #{gcn_forward.4} parent=11 // pred_check_branch
        %98 = sbr.rel (%p96) target = $region16
      $region15: #{gcn_forward.4} parent=11 // pred_region
        _
      $region16: #{gcn_forward.4} parent=11 // pred_fallthru
        _
    $region12: #{gcn_forward.4} parent=5 // pred_fallthru
      _
    %p99 = scmp.lt.s32.totalorder %s8, 2
    // Predicated region
    $region17: #{gcn_forward.4} parent=5 // pred_check
      %p100 = pneg %p99
    $region18: #{gcn_forward.4} parent=5 // pred_check_branch
      %102 = sbr.rel (%p100) target = $region20
    $region19: #{gcn_forward.4} parent=5 // pred_region
      // Predicated region
      $region21: #{gcn_forward.4} parent=19 // pred_check
        %p103 = pneg %p28
      $region22: #{gcn_forward.4} parent=19 // pred_check_branch
        %105 = sbr.rel (%p103) target = $region24
      $region23: #{gcn_forward.4} parent=19 // pred_region
        %s106 = smul.u32 16, %s8
        %p107 = scmp.lt.s32.totalorder %s106, 31
        %s108 = scalar_select %p107, %s106, 31
        %s109 = smul.addr %s108, 8
        %s110 = scalar_lea.vmem %s0, %s109
        %s111 = smul.u32 16, %s8
      $region24: #{gcn_forward.4} parent=19 // pred_fallthru
        _
    $region20: #{gcn_forward.4} parent=5 // pred_fallthru
      _
    %p112 = scmp.le.s32.totalorder 1, %s8
    %p113 = scmp.lt.s32.totalorder %s8, 3
    %p114 = pnand %p112, %p113
    %p115 = pneg %p114
    // Predicated region
    $region25: #{gcn_forward.4} parent=5 // pred_check
      _
    $region26: #{gcn_forward.4} parent=5 // pred_check_branch
      %117 = sbr.rel (%p114) target = $region28
    $region27: #{gcn_forward.4} parent=5 // pred_region
      %s118 = ssub.s32 %s8, 1
      %s119 = smul.u32 16, %s13
      %p120 = scmp.lt.s32.totalorder %s119, 31
      %s121 = scalar_select %p120, %s119, 31
      %s122 = smul.addr %s121, 8
      %s123 = scalar_lea.vmem %s0, %s122
      %p124 = pneg %p34
      %p125 = pneg %p31
      %p126 = pneg %p55
      %p127 = pneg %p52
      %p128 = pneg %p81
      %p129 = pneg %p78
      %s130 = smul.u32 16, %s13
      %p131 = scmp.lt.s32.totalorder %s130, 31
      %s132 = scalar_select %p131, %s130, 31
      %s133 = smul.addr %s132, 8
      %s134 = scalar_lea.vmem %s2, %s133
      %s135 = smul.u32 16, %s13
      %p136 = scmp.lt.s32.totalorder %s135, 31
      %s137 = scalar_select %p136, %s135, 31
      %s138 = smul.addr %s137, 8
      %s139 = scalar_lea.vmem %s0, %s138
      %s140 = smul.u32 16, %s13
      %s141 = smul.u32 16, %s13
      %p142 = scmp.lt.s32.totalorder %s141, 31
      %s143 = scalar_select %p142, %s141, 31
      %s144 = smul.addr %s143, 8
      %s145 = scalar_lea.vmem %s2, %s144
      %s146 = smul.u32 16, %s13
      %v147 = vld [vmem:[%s139] sm:$0xff]
      %v148 = vld [vmem:[%s139 + $0x8] sm:$0xff]
      %v149 = vld [vmem:[%s139 + $0x10] sm:$0xff]
      %v150 = vld [vmem:[%s139 + $0x18] sm:$0xff]
      %v151 = vld [vmem:[%s139 + $0x20] sm:$0xff]
      %v152 = vld [vmem:[%s139 + $0x28] sm:$0xff]
      %v153 = vld [vmem:[%s139 + $0x30] sm:$0xff]
      %v154 = vld [vmem:[%s139 + $0x38] sm:$0xff]
      %v155 = vld [vmem:[%s139 + $0x40] sm:$0xff]
      %v156 = vld [vmem:[%s139 + $0x48] sm:$0xff]
      %v157 = vld [vmem:[%s139 + $0x50] sm:$0xff]
      %v158 = vld [vmem:[%s139 + $0x58] sm:$0xff]
      %v159 = vld [vmem:[%s139 + $0x60] sm:$0xff]
      %v160 = vld [vmem:[%s139 + $0x68] sm:$0xff]
      %v161 = vld [vmem:[%s139 + $0x70] sm:$0xff]
      %v162 = vld [vmem:[%s139 + $0x78] sm:$0xff]
      %v163 = vld [vmem:[%s1] sm:$0xff]
      %v164 = vld [vmem:[%s1 + $0x8] sm:$0xff]
      %v165 = vld [vmem:[%s1 + $0x10] sm:$0xff]
      %v166 = vld [vmem:[%s1 + $0x18] sm:$0xff]
      %v167 = vld [vmem:[%s1 + $0x20] sm:$0xff]
      %v168 = vld [vmem:[%s1 + $0x28] sm:$0xff]
      %v169 = vld [vmem:[%s1 + $0x30] sm:$0xff]
      %v170 = vld [vmem:[%s1 + $0x38] sm:$0xff]
      %v171 = vld [vmem:[%s1 + $0x40] sm:$0xff]
      %v172 = vld [vmem:[%s1 + $0x48] sm:$0xff]
      %v173 = vld [vmem:[%s1 + $0x50] sm:$0xff]
      %v174 = vld [vmem:[%s1 + $0x58] sm:$0xff]
      %v175 = vld [vmem:[%s1 + $0x60] sm:$0xff]
      %v176 = vld [vmem:[%s1 + $0x68] sm:$0xff]
      %v177 = vld [vmem:[%s1 + $0x70] sm:$0xff]
      %v178 = vld [vmem:[%s1 + $0x78] sm:$0xff]
      %179 = vmatprep.subr.mxu0 0.0
      %180 = vmatpush1.msra.mxu0 %v163
      %181 = vmatprep.subr.mxu0 0.0
      %182 = vmatpush1.msra.mxu0 %v164
      %183 = vmatprep.subr.mxu0 0.0
      %184 = vmatpush1.msra.mxu0 %v165
      %185 = vmatprep.subr.mxu0 0.0
      %186 = vmatpush1.msra.mxu0 %v166
      %187 = vmatprep.subr.mxu0 0.0
      %188 = vmatpush1.msra.mxu0 %v167
      %189 = vmatprep.subr.mxu0 0.0
      %190 = vmatpush1.msra.mxu0 %v168
      %191 = vmatprep.subr.mxu0 0.0
      %192 = vmatpush1.msra.mxu0 %v169
      %193 = vmatprep.subr.mxu0 0.0
      %194 = vmatpush1.msra.mxu0 %v170
      %195 = vmatprep.subr.mxu0 0.0
      %196 = vmatpush1.msra.mxu0 %v171
      %197 = vmatprep.subr.mxu0 0.0
      %198 = vmatpush1.msra.mxu0 %v172
      %199 = vmatprep.subr.mxu0 0.0
      %200 = vmatpush1.msra.mxu0 %v173
      %201 = vmatprep.subr.mxu0 0.0
      %202 = vmatpush1.msra.mxu0 %v174
      %203 = vmatprep.subr.mxu0 0.0
      %204 = vmatpush1.msra.mxu0 %v175
      %205 = vmatprep.subr.mxu0 0.0
      %206 = vmatpush1.msra.mxu0 %v176
      %207 = vmatprep.subr.mxu0 0.0
      %208 = vmatpush1.msra.mxu0 %v177
      %209 = vmatprep.subr.mxu0 0.0
      %210 = vmatpush1.msra.mxu0 %v178
      %211 = vmatprep.subr.mxu0 0.0
      %212 = vmatpush1.msra.mxu0 0.0
      %213 = vmatprep.subr.mxu0 0.0
      %214 = vmatpush1.msra.mxu0 0.0
      %215 = vmatprep.subr.mxu0 0.0
      %216 = vmatpush1.msra.mxu0 0.0
      %217 = vmatprep.subr.mxu0 0.0
      %218 = vmatpush1.msra.mxu0 0.0
      %219 = vmatprep.subr.mxu0 0.0
      %220 = vmatpush1.msra.mxu0 0.0
      %221 = vmatprep.subr.mxu0 0.0
      %222 = vmatpush1.msra.mxu0 0.0
      %223 = vmatprep.subr.mxu0 0.0
      %224 = vmatpush1.msra.mxu0 0.0
      %225 = vmatprep.subr.mxu0 0.0
      %226 = vmatpush1.msra.mxu0 0.0
      %227 = vmatprep.subr.mxu0 0.0
      %228 = vmatpush1.msra.mxu0 0.0
      %229 = vmatprep.subr.mxu0 0.0
      %230 = vmatpush1.msra.mxu0 0.0
      %231 = vmatprep.subr.mxu0 0.0
      %232 = vmatpush1.msra.mxu0 0.0
      %233 = vmatprep.subr.mxu0 0.0
      %234 = vmatpush1.msra.mxu0 0.0
      %235 = vmatprep.subr.mxu0 0.0
      %236 = vmatpush1.msra.mxu0 0.0
      %237 = vmatprep.subr.mxu0 0.0
      %238 = vmatpush1.msra.mxu0 0.0
      %239 = vmatprep.subr.mxu0 0.0
      %240 = vmatpush1.msra.mxu0 0.0
      %241 = vmatprep.subr.mxu0 0.0
      %242 = vmatpush1.msra.mxu0 0.0
      %243 = vmatprep.mubr.f32.mxu0 0.0
      %244 = vmatmul.mubr.f32.gmra.mrb[0].mxu0 %v147
      %v245 = vpop.f32.mrb[0].mxu0
      %v246 = vadd.f32 0.0, %v245
      %v247 = vpop.f32.mrb[0].mxu0
      %248 = vmatprep.mubr.f32.mxu0 0.0
      %249 = vmatmul.mubr.f32.gmra.mrb[0].mxu0 %v148
      %v250 = vpop.f32.mrb[0].mxu0
      %v251 = vadd.f32 0.0, %v250
      %v252 = vpop.f32.mrb[0].mxu0
      %253 = vmatprep.mubr.f32.mxu0 0.0
      %254 = vmatmul.mubr.f32.gmra.mrb[0].mxu0 %v149
      %v255 = vpop.f32.mrb[0].mxu0
      %v256 = vadd.f32 0.0, %v255
      %v257 = vpop.f32.mrb[0].mxu0
      %258 = vmatprep.mubr.f32.mxu0 0.0
      %259 = vmatmul.mubr.f32.gmra.mrb[0].mxu0 %v150
      %v260 = vpop.f32.mrb[0].mxu0
      %v261 = vadd.f32 0.0, %v260
      %v262 = vpop.f32.mrb[0].mxu0
      %263 = vmatprep.mubr.f32.mxu0 0.0
      %264 = vmatmul.mubr.f32.gmra.mrb[0].mxu0 %v151
      %v265 = vpop.f32.mrb[0].mxu0
      %v266 = vadd.f32 0.0, %v265
      %v267 = vpop.f32.mrb[0].mxu0
      %268 = vmatprep.mubr.f32.mxu0 0.0
      %269 = vmatmul.mubr.f32.gmra.mrb[0].mxu0 %v152
      %v270 = vpop.f32.mrb[0].mxu0
      %v271 = vadd.f32 0.0, %v270
      %v272 = vpop.f32.mrb[0].mxu0
      %273 = vmatprep.mubr.f32.mxu0 0.0
      %274 = vmatmul.mubr.f32.gmra.mrb[0].mxu0 %v153
      %v275 = vpop.f32.mrb[0].mxu0
      %v276 = vadd.f32 0.0, %v275
      %v277 = vpop.f32.mrb[0].mxu0
      %278 = vmatprep.mubr.f32.mxu0 0.0
      %279 = vmatmul.mubr.f32.gmra.mrb[0].mxu0 %v154
      %v280 = vpop.f32.mrb[0].mxu0
      %v281 = vadd.f32 0.0, %v280
      %v282 = vpop.f32.mrb[0].mxu0
      %283 = vmatprep.mubr.f32.mxu0 0.0
      %284 = vmatmul.mubr.f32.gmra.mrb[0].mxu0 %v155
      %v285 = vpop.f32.mrb[0].mxu0
      %v286 = vadd.f32 0.0, %v285
      %v287 = vpop.f32.mrb[0].mxu0
      %288 = vmatprep.mubr.f32.mxu0 0.0
      %289 = vmatmul.mubr.f32.gmra.mrb[0].mxu0 %v156
      %v290 = vpop.f32.mrb[0].mxu0
      %v291 = vadd.f32 0.0, %v290
      %v292 = vpop.f32.mrb[0].mxu0
      %293 = vmatprep.mubr.f32.mxu0 0.0
      %294 = vmatmul.mubr.f32.gmra.mrb[0].mxu0 %v157
      %v295 = vpop.f32.mrb[0].mxu0
      %v296 = vadd.f32 0.0, %v295
      %v297 = vpop.f32.mrb[0].mxu0
      %298 = vmatprep.mubr.f32.mxu0 0.0
      %299 = vmatmul.mubr.f32.gmra.mrb[0].mxu0 %v158
      %v300 = vpop.f32.mrb[0].mxu0
      %v301 = vadd.f32 0.0, %v300
      %v302 = vpop.f32.mrb[0].mxu0
      %303 = vmatprep.mubr.f32.mxu0 0.0
      %304 = vmatmul.mubr.f32.gmra.mrb[0].mxu0 %v159
      %v305 = vpop.f32.mrb[0].mxu0
      %v306 = vadd.f32 0.0, %v305
      %v307 = vpop.f32.mrb[0].mxu0
      %308 = vmatprep.mubr.f32.mxu0 0.0
      %309 = vmatmul.mubr.f32.gmra.mrb[0].mxu0 %v160
      %v310 = vpop.f32.mrb[0].mxu0
      %v311 = vadd.f32 0.0, %v310
      %v312 = vpop.f32.mrb[0].mxu0
      %313 = vmatprep.mubr.f32.mxu0 0.0
      %314 = vmatmul.mubr.f32.gmra.mrb[0].mxu0 %v161
      %v315 = vpop.f32.mrb[0].mxu0
      %v316 = vadd.f32 0.0, %v315
      %v317 = vpop.f32.mrb[0].mxu0
      %318 = vmatprep.mubr.f32.mxu0 0.0
      %319 = vmatmul.mubr.f32.gmra.mrb[0].mxu0 %v162
      %v320 = vpop.f32.mrb[0].mxu0
      %v321 = vadd.f32 0.0, %v320
      %v322 = vpop.f32.mrb[0].mxu0
      %323 = vdwg.mxu0
      %324 = vst [vmem:[%s145] sm:$0xff] %v246
      %325 = vst [vmem:[%s145 + $0x8] sm:$0xff] %v251
      %326 = vst [vmem:[%s145 + $0x10] sm:$0xff] %v256
      %327 = vst [vmem:[%s145 + $0x18] sm:$0xff] %v261
      %328 = vst [vmem:[%s145 + $0x20] sm:$0xff] %v266
      %329 = vst [vmem:[%s145 + $0x28] sm:$0xff] %v271
      %330 = vst [vmem:[%s145 + $0x30] sm:$0xff] %v276
      %331 = vst [vmem:[%s145 + $0x38] sm:$0xff] %v281
      %332 = vst [vmem:[%s145 + $0x40] sm:$0xff] %v286
      %333 = vst [vmem:[%s145 + $0x48] sm:$0xff] %v291
      %334 = vst [vmem:[%s145 + $0x50] sm:$0xff] %v296
      %335 = vst [vmem:[%s145 + $0x58] sm:$0xff] %v301
      %336 = vst [vmem:[%s145 + $0x60] sm:$0xff] %v306
      %337 = vst [vmem:[%s145 + $0x68] sm:$0xff] %v311
      %338 = vst [vmem:[%s145 + $0x70] sm:$0xff] %v316
      %339 = vst [vmem:[%s145 + $0x78] sm:$0xff] %v321
      %s340 = smul.u32 16, %s13
      %p341 = scmp.lt.s32.totalorder %s340, 31
      %s342 = scalar_select %p341, %s340, 31
      %s343 = smul.addr %s342, 8
      %s344 = scalar_lea.vmem %s2, %s343
      // Predicated region
      $region29: #{gcn_forward.4} parent=27 // pred_check
        %p345 = pneg %p78
      $region30: #{gcn_forward.4} parent=27 // pred_check_branch
        %347 = sbr.rel (%p345) target = $region32
      $region31: #{gcn_forward.4} parent=27 // pred_region
        %s348 = smul.u32 16, %s13
      $region32: #{gcn_forward.4} parent=27 // pred_fallthru
        _
    $region28: #{gcn_forward.4} parent=5 // pred_fallthru
      _
    %p349 = scmp.le.s32.totalorder 2, %s8
    // Predicated region
    $region33: #{gcn_forward.4} parent=5 // pred_check
      %p350 = pneg %p349
    $region34: #{gcn_forward.4} parent=5 // pred_check_branch
      %352 = sbr.rel (%p350) target = $region36
    $region35: #{gcn_forward.4} parent=5 // pred_region
      %s353 = ssub.s32 %s8, 2
      // Predicated region
      $region37: #{gcn_forward.4} parent=35 // pred_check
        %p354 = pneg %p84
      $region38: #{gcn_forward.4} parent=35 // pred_check_branch
        %356 = sbr.rel (%p354) target = $region40
      $region39: #{gcn_forward.4} parent=35 // pred_region
        %s357 = smul.u32 16, %s14
        %p358 = scmp.lt.s32.totalorder %s357, 31
        %s359 = scalar_select %p358, %s357, 31
        %s360 = smul.addr %s359, 8
        %s361 = scalar_lea.vmem %s2, %s360
      $region40: #{gcn_forward.4} parent=35 // pred_fallthru
        _
    $region36: #{gcn_forward.4} parent=5 // pred_fallthru
      _
  $region6: #{gcn_forward.4} parent=0 // loop_footer
    %s12 = sadd.s32 1, %s8
  $region7: #{gcn_forward.4} parent=0 // loop_footer_branch
    %7 = sbr.rel target = $region3
  $region8: #{gcn_forward.4} parent=0 // loop_exit
    _

// kernel: gcn_forward.5
$region0: #{gcn_forward.5}
  #allocation0 [shape = 'u32[]', space=smem, size = 0x4, offset = 0x4, fixed_abs, tag = 'smem constant byte address 0x4 - core index']
  #allocation1 [shape = 'u32[144,128]{1,0:T(1,128)}', space=vmem, size = 0x12000, scoped, tag = 'internal scratch']
  #allocation2 [shape = 'f32[128,128]{1,0:T(8,128)}', space=vmem, size = 0x10000, scoped, tag = 'scratch operand']
  %s0 = inlined_call_operand.vmem [shape: f32[256,256], index: 0, kind: input, shape index: {}]
  %s1 = inlined_call_operand.vmem [shape: f32[256,128], index: 1, kind: input, shape index: {}]
  %s2 = inlined_call_operand.vmem [shape: f32[1,128], index: 2, kind: input, shape index: {}]
  %s3 = inlined_call_operand.vmem [shape: f32[128,128], index: 3, kind: input, shape index: {}]
  %s4 = inlined_call_operand.vmem [shape: f32[256,128], index: 4, kind: output, shape index: {}]
  %s5 = sld [smem:[#allocation0]]
  $region57: #{gcn_forward.5} parent=0
    _
  %s7 = ssub.s32 1, %s5
  %s8 = scalar_select 0, %s7, %s5
  loop: start=0, step=1, limit=4
  $region2: #{gcn_forward.5} parent=0 // loop_pre_header
    _
  $region3: #{gcn_forward.5} parent=0 // loop_header
    %s10 = sphi 0, %s14
    %p11 = scmp.ge.s32.totalorder %s10, 4
    %s17 = sphi 0, %s29
    %s18 = sphi 0, %s25
    %s19 = sphi 0, %s17
    %s20 = sphi 0, %s18
    %s21 = sphi 0, %s19
    %s22 = sphi 0, %s20
    %s34 = sphi 0, %s36
    %s37 = sphi 0, %s34
    %s38 = sphi 0, %s37
    %s54 = sphi 0, %s38
    %s58 = sphi 0, %s58
    %s60 = sphi 0, %s58
    %s61 = sphi 0, %s60
    %s75 = sphi 0, %s61
    %s79 = sphi 0, %s79
    %s81 = sphi 0, %s79
    %s82 = sphi 0, %s81
    %s96 = sphi 0, %s82
    %s100 = sphi 0, %s100
    %s102 = sphi 0, %s100
    %s103 = sphi 0, %s102
    %s117 = sphi 0, %s103
    %s123 = sphi 0, %s125
    %s126 = sphi 0, %s123
    %s127 = sphi 0, %s126
    %s143 = sphi 0, %s127
  $region4: #{gcn_forward.5} parent=0 // loop_header_branch
    %13 = sbr.rel (%p11) target = $region8
  $region5: #{gcn_forward.5} parent=0 // loop_body
    %s15 = ssub.s32 %s10, 1
    %s16 = ssub.s32 %s10, 2
    %s23 = sadd.s32 1, %s18
    %p24 = scmp.ge.s32.totalorder %s23, 1
    %s25 = scalar_select %p24, 0, %s23
    %s26 = sadd.s32 1, %s17
    %s27 = scalar_select %p24, %s26, %s17
    %p28 = scmp.ge.s32.totalorder %s27, 2
    %s29 = scalar_select %p28, 0, %s27
    %s30 = ssub.s32 %s17, %s29
    %s31 = ssub.s32 %s18, %s25
    %s32 = sor.u32 %s30, %s31
    %p33 = scmp.eq.s32.totalorder %s32, 0
    %s35 = sadd.s32 %s34, 1
    %s36 = scalar_select %p33, %s34, %s35
    %p39 = pneg %p33
    %p40 = scmp.eq.s32.totalorder %s10, 1
    %p41 = por %p39, %p40
    %p42 = scmp.ne.s32.totalorder %s34, %s37
    %p43 = scmp.eq.s32.totalorder %s10, 0
    %p44 = por %p42, %p43
    %p45 = scmp.ne.s32.totalorder %s34, %s37
    %p46 = scmp.eq.s32.totalorder %s15, 1
    %p47 = por %p45, %p46
    %p48 = scmp.ne.s32.totalorder %s37, %s38
    %p49 = scmp.eq.s32.totalorder %s15, 0
    %p50 = por %p48, %p49
    %p51 = scmp.ne.s32.totalorder %s37, %s38
    %p52 = scmp.eq.s32.totalorder %s16, 1
    %p53 = por %p51, %p52
    %p55 = scmp.ne.s32.totalorder %s38, %s54
    %p56 = scmp.eq.s32.totalorder %s16, 0
    %p57 = por %p55, %p56
    %s59 = sadd.s32 %s58, 1
    %p62 = scmp.eq.s32.totalorder %s10, 1
    %p63 = scmp.ne.s32.totalorder %s58, %s60
    %p64 = scmp.eq.s32.totalorder %s10, 0
    %p65 = por %p63, %p64
    %p66 = scmp.ne.s32.totalorder %s58, %s60
    %p67 = scmp.eq.s32.totalorder %s15, 1
    %p68 = por %p66, %p67
    %p69 = scmp.ne.s32.totalorder %s60, %s61
    %p70 = scmp.eq.s32.totalorder %s15, 0
    %p71 = por %p69, %p70
    %p72 = scmp.ne.s32.totalorder %s60, %s61
    %p73 = scmp.eq.s32.totalorder %s16, 1
    %p74 = por %p72, %p73
    %p76 = scmp.ne.s32.totalorder %s61, %s75
    %p77 = scmp.eq.s32.totalorder %s16, 0
    %p78 = por %p76, %p77
    %s80 = sadd.s32 %s79, 1
    %p83 = scmp.eq.s32.totalorder %s10, 1
    %p84 = scmp.ne.s32.totalorder %s79, %s81
    %p85 = scmp.eq.s32.totalorder %s10, 0
    %p86 = por %p84, %p85
    %p87 = scmp.ne.s32.totalorder %s79, %s81
    %p88 = scmp.eq.s32.totalorder %s15, 1
    %p89 = por %p87, %p88
    %p90 = scmp.ne.s32.totalorder %s81, %s82
    %p91 = scmp.eq.s32.totalorder %s15, 0
    %p92 = por %p90, %p91
    %p93 = scmp.ne.s32.totalorder %s81, %s82
    %p94 = scmp.eq.s32.totalorder %s16, 1
    %p95 = por %p93, %p94
    %p97 = scmp.ne.s32.totalorder %s82, %s96
    %p98 = scmp.eq.s32.totalorder %s16, 0
    %p99 = por %p97, %p98
    %s101 = sadd.s32 %s100, 1
    %p104 = scmp.eq.s32.totalorder %s10, 1
    %p105 = scmp.ne.s32.totalorder %s100, %s102
    %p106 = scmp.eq.s32.totalorder %s10, 0
    %p107 = por %p105, %p106
    %p108 = scmp.ne.s32.totalorder %s100, %s102
    %p109 = scmp.eq.s32.totalorder %s15, 1
    %p110 = por %p108, %p109
    %p111 = scmp.ne.s32.totalorder %s102, %s103
    %p112 = scmp.eq.s32.totalorder %s15, 0
    %p113 = por %p111, %p112
    %p114 = scmp.ne.s32.totalorder %s102, %s103
    %p115 = scmp.eq.s32.totalorder %s16, 1
    %p116 = por %p114, %p115
    %p118 = scmp.ne.s32.totalorder %s103, %s117
    %p119 = scmp.eq.s32.totalorder %s16, 0
    %p120 = por %p118, %p119
    %s121 = ssub.s32 %s17, %s29
    %p122 = scmp.eq.s32.totalorder %s121, 0
    %s124 = sadd.s32 %s123, 1
    %s125 = scalar_select %p122, %s123, %s124
    %p128 = pneg %p122
    %p129 = scmp.eq.s32.totalorder %s10, 1
    %p130 = por %p128, %p129
    %p131 = scmp.ne.s32.totalorder %s123, %s126
    %p132 = scmp.eq.s32.totalorder %s10, 0
    %p133 = por %p131, %p132
    %p134 = scmp.ne.s32.totalorder %s123, %s126
    %p135 = scmp.eq.s32.totalorder %s15, 1
    %p136 = por %p134, %p135
    %p137 = scmp.ne.s32.totalorder %s126, %s127
    %p138 = scmp.eq.s32.totalorder %s15, 0
    %p139 = por %p137, %p138
    %p140 = scmp.ne.s32.totalorder %s126, %s127
    %p141 = scmp.eq.s32.totalorder %s16, 1
    %p142 = por %p140, %p141
    %p144 = scmp.ne.s32.totalorder %s127, %s143
    %p145 = scmp.eq.s32.totalorder %s16, 0
    %p146 = por %p144, %p145
    %p147 = scmp.le.s32.totalorder 1, %s10
    %p148 = scmp.lt.s32.totalorder %s10, 3
    %p149 = pnand %p147, %p148
    %p150 = pneg %p149
    // Predicated region
    $region9: #{gcn_forward.5} parent=5 // pred_check
      _
    $region10: #{gcn_forward.5} parent=5 // pred_check_branch
      %152 = sbr.rel (%p149) target = $region12
    $region11: #{gcn_forward.5} parent=5 // pred_region
      %s153 = ssub.s32 %s10, 1
      // Predicated region
      $region13: #{gcn_forward.5} parent=11 // pred_check
        %p154 = pneg %p71
      $region14: #{gcn_forward.5} parent=11 // pred_check_branch
        %156 = sbr.rel (%p154) target = $region16
      $region15: #{gcn_forward.5} parent=11 // pred_region
        _
      $region16: #{gcn_forward.5} parent=11 // pred_fallthru
        _
      // Predicated region
      $region17: #{gcn_forward.5} parent=11 // pred_check
        %p157 = pneg %p92
      $region18: #{gcn_forward.5} parent=11 // pred_check_branch
        %159 = sbr.rel (%p157) target = $region20
      $region19: #{gcn_forward.5} parent=11 // pred_region
        _
      $region20: #{gcn_forward.5} parent=11 // pred_fallthru
        _
      // Predicated region
      $region21: #{gcn_forward.5} parent=11 // pred_check
        %p160 = pneg %p113
      $region22: #{gcn_forward.5} parent=11 // pred_check_branch
        %162 = sbr.rel (%p160) target = $region24
      $region23: #{gcn_forward.5} parent=11 // pred_region
        _
      $region24: #{gcn_forward.5} parent=11 // pred_fallthru
        _
    $region12: #{gcn_forward.5} parent=5 // pred_fallthru
      _
    %p163 = scmp.lt.s32.totalorder %s10, 2
    // Predicated region
    $region25: #{gcn_forward.5} parent=5 // pred_check
      %p164 = pneg %p163
    $region26: #{gcn_forward.5} parent=5 // pred_check_branch
      %166 = sbr.rel (%p164) target = $region28
    $region27: #{gcn_forward.5} parent=5 // pred_region
      // Predicated region
      $region29: #{gcn_forward.5} parent=27 // pred_check
        %p167 = pneg %p44
      $region30: #{gcn_forward.5} parent=27 // pred_check_branch
        %169 = sbr.rel (%p167) target = $region32
      $region31: #{gcn_forward.5} parent=27 // pred_region
        %s170 = smul.u32 16, %s17
        %s171 = smul.u32 2, %s18
        %p172 = scmp.lt.s32.totalorder %s170, 31
        %s173 = scalar_select %p172, %s170, 31
        %p174 = scmp.lt.s32.totalorder %s171, 1
        %s175 = scalar_select %p174, %s171, 1
        %s176 = smul.addr %s173, 2
        %s177 = sadd.s32 %s175, %s176
        %s178 = smul.addr %s177, 8
        %s179 = scalar_lea.vmem %s0, %s178
        %s180 = smul.u32 16, %s17
        %s181 = smul.u32 2, %s18
      $region32: #{gcn_forward.5} parent=27 // pred_fallthru
        _
    $region28: #{gcn_forward.5} parent=5 // pred_fallthru
      _
    %p182 = scmp.le.s32.totalorder 1, %s10
    %p183 = scmp.lt.s32.totalorder %s10, 3
    %p184 = pnand %p182, %p183
    %p185 = pneg %p184
    // Predicated region
    $region33: #{gcn_forward.5} parent=5 // pred_check
      _
    $region34: #{gcn_forward.5} parent=5 // pred_check_branch
      %187 = sbr.rel (%p184) target = $region36
    $region35: #{gcn_forward.5} parent=5 // pred_region
      %s188 = ssub.s32 %s10, 1
      %s189 = smul.u32 16, %s19
      %s190 = smul.u32 2, %s20
      %p191 = scmp.lt.s32.totalorder %s189, 31
      %s192 = scalar_select %p191, %s189, 31
      %p193 = scmp.lt.s32.totalorder %s190, 1
      %s194 = scalar_select %p193, %s190, 1
      %s195 = smul.addr %s192, 2
      %s196 = sadd.s32 %s194, %s195
      %s197 = smul.addr %s196, 8
      %s198 = scalar_lea.vmem %s0, %s197
      %p199 = pneg %p50
      %p200 = pneg %p47
      %p201 = pneg %p71
      %p202 = pneg %p68
      %p203 = pneg %p92
      %p204 = pneg %p89
      %p205 = pneg %p113
      %p206 = pneg %p110
      %p207 = pneg %p139
      %p208 = pneg %p136
      %s209 = smul.u32 16, %s19
      %p210 = scmp.lt.s32.totalorder %s209, 31
      %s211 = scalar_select %p210, %s209, 31
      %s212 = smul.addr %s211, 8
      %s213 = scalar_lea.vmem %s4, %s212
      %s214 = smul.u32 16, %s19
      %s215 = smul.u32 2, %s20
      %p216 = scmp.lt.s32.totalorder %s214, 31
      %s217 = scalar_select %p216, %s214, 31
      %p218 = scmp.lt.s32.totalorder %s215, 1
      %s219 = scalar_select %p218, %s215, 1
      %s220 = smul.addr %s217, 2
      %s221 = sadd.s32 %s219, %s220
      %s222 = smul.addr %s221, 8
      %s223 = scalar_lea.vmem %s0, %s222
      %s224 = smul.u32 16, %s19
      %s225 = smul.u32 2, %s20
      %s226 = smul.u32 16, %s19
      %p227 = scmp.lt.s32.totalorder %s226, 31
      %s228 = scalar_select %p227, %s226, 31
      %s229 = smul.addr %s228, 8
      %s230 = scalar_lea.vmem %s4, %s229
      %s231 = smul.u32 16, %s19
      %p232 = scmp.eq.s32.totalorder %s20, 0
      // Predicated region
      $region37: #{gcn_forward.5} parent=35 // pred_check
        %p233 = pneg %p232
      $region38: #{gcn_forward.5} parent=35 // pred_check_branch
        %235 = sbr.rel (%p233) target = $region40
      $region39: #{gcn_forward.5} parent=35 // pred_region
        %236 = vst [vmem:[#allocation2] sm:$0xff] 0.0
        %237 = vst [vmem:[#allocation2 + $0x8] sm:$0xff] 0.0
        %238 = vst [vmem:[#allocation2 + $0x10] sm:$0xff] 0.0
        %239 = vst [vmem:[#allocation2 + $0x18] sm:$0xff] 0.0
        %240 = vst [vmem:[#allocation2 + $0x20] sm:$0xff] 0.0
        %241 = vst [vmem:[#allocation2 + $0x28] sm:$0xff] 0.0
        %242 = vst [vmem:[#allocation2 + $0x30] sm:$0xff] 0.0
        %243 = vst [vmem:[#allocation2 + $0x38] sm:$0xff] 0.0
        %244 = vst [vmem:[#allocation2 + $0x40] sm:$0xff] 0.0
        %245 = vst [vmem:[#allocation2 + $0x48] sm:$0xff] 0.0
        %246 = vst [vmem:[#allocation2 + $0x50] sm:$0xff] 0.0
        %247 = vst [vmem:[#allocation2 + $0x58] sm:$0xff] 0.0
        %248 = vst [vmem:[#allocation2 + $0x60] sm:$0xff] 0.0
        %249 = vst [vmem:[#allocation2 + $0x68] sm:$0xff] 0.0
        %250 = vst [vmem:[#allocation2 + $0x70] sm:$0xff] 0.0
        %251 = vst [vmem:[#allocation2 + $0x78] sm:$0xff] 0.0
      $region40: #{gcn_forward.5} parent=35 // pred_fallthru
        _
      %s252 = smul.u32 %s20, 256
      %s253 = scalar_lea.vmem %s1, %s252
      %v254 = vld [vmem:[%s253] sm:$0xff]
      %v255 = vld [vmem:[%s253 + $0x8] sm:$0xff]
      %v256 = vld [vmem:[%s253 + $0x10] sm:$0xff]
      %v257 = vld [vmem:[%s253 + $0x18] sm:$0xff]
      %v258 = vld [vmem:[%s253 + $0x20] sm:$0xff]
      %v259 = vld [vmem:[%s253 + $0x28] sm:$0xff]
      %v260 = vld [vmem:[%s253 + $0x30] sm:$0xff]
      %v261 = vld [vmem:[%s253 + $0x38] sm:$0xff]
      %v262 = vld [vmem:[%s253 + $0x40] sm:$0xff]
      %v263 = vld [vmem:[%s253 + $0x48] sm:$0xff]
      %v264 = vld [vmem:[%s253 + $0x50] sm:$0xff]
      %v265 = vld [vmem:[%s253 + $0x58] sm:$0xff]
      %v266 = vld [vmem:[%s253 + $0x60] sm:$0xff]
      %v267 = vld [vmem:[%s253 + $0x68] sm:$0xff]
      %v268 = vld [vmem:[%s253 + $0x70] sm:$0xff]
      %v269 = vld [vmem:[%s253 + $0x78] sm:$0xff]
      %v270 = vld [vmem:[%s253 + $0x80] sm:$0xff]
      %v271 = vld [vmem:[%s253 + $0x88] sm:$0xff]
      %v272 = vld [vmem:[%s253 + $0x90] sm:$0xff]
      %v273 = vld [vmem:[%s253 + $0x98] sm:$0xff]
      %v274 = vld [vmem:[%s253 + $0xa0] sm:$0xff]
      %v275 = vld [vmem:[%s253 + $0xa8] sm:$0xff]
      %v276 = vld [vmem:[%s253 + $0xb0] sm:$0xff]
      %v277 = vld [vmem:[%s253 + $0xb8] sm:$0xff]
      %v278 = vld [vmem:[%s253 + $0xc0] sm:$0xff]
      %v279 = vld [vmem:[%s253 + $0xc8] sm:$0xff]
      %v280 = vld [vmem:[%s253 + $0xd0] sm:$0xff]
      %v281 = vld [vmem:[%s253 + $0xd8] sm:$0xff]
      %v282 = vld [vmem:[%s253 + $0xe0] sm:$0xff]
      %v283 = vld [vmem:[%s253 + $0xe8] sm:$0xff]
      %v284 = vld [vmem:[%s253 + $0xf0] sm:$0xff]
      %v285 = vld [vmem:[%s253 + $0xf8] sm:$0xff]
      %v286 = vld [vmem:[#allocation2] sm:$0xff]
      %v287 = vld [vmem:[#allocation2 + $0x8] sm:$0xff]
      %v288 = vld [vmem:[#allocation2 + $0x10] sm:$0xff]
      %v289 = vld [vmem:[#allocation2 + $0x18] sm:$0xff]
      %v290 = vld [vmem:[#allocation2 + $0x20] sm:$0xff]
      %v291 = vld [vmem:[#allocation2 + $0x28] sm:$0xff]
      %v292 = vld [vmem:[#allocation2 + $0x30] sm:$0xff]
      %v293 = vld [vmem:[#allocation2 + $0x38] sm:$0xff]
      %v294 = vld [vmem:[#allocation2 + $0x40] sm:$0xff]
      %v295 = vld [vmem:[#allocation2 + $0x48] sm:$0xff]
      %v296 = vld [vmem:[#allocation2 + $0x50] sm:$0xff]
      %v297 = vld [vmem:[#allocation2 + $0x58] sm:$0xff]
      %v298 = vld [vmem:[#allocation2 + $0x60] sm:$0xff]
      %v299 = vld [vmem:[#allocation2 + $0x68] sm:$0xff]
      %v300 = vld [vmem:[#allocation2 + $0x70] sm:$0xff]
      %v301 = vld [vmem:[#allocation2 + $0x78] sm:$0xff]
      %v302 = vld [vmem:[%s223] sm:$0xff]
      %v303 = vld [vmem:[%s223 + $0x8] sm:$0xff]
      %v304 = vld [vmem:[%s223 + $0x10] sm:$0xff]
      %v305 = vld [vmem:[%s223 + $0x18] sm:$0xff]
      %v306 = vld [vmem:[%s223 + $0x20] sm:$0xff]
      %v307 = vld [vmem:[%s223 + $0x28] sm:$0xff]
      %v308 = vld [vmem:[%s223 + $0x30] sm:$0xff]
      %v309 = vld [vmem:[%s223 + $0x38] sm:$0xff]
      %v310 = vld [vmem:[%s223 + $0x40] sm:$0xff]
      %v311 = vld [vmem:[%s223 + $0x48] sm:$0xff]
      %v312 = vld [vmem:[%s223 + $0x50] sm:$0xff]
      %v313 = vld [vmem:[%s223 + $0x58] sm:$0xff]
      %v314 = vld [vmem:[%s223 + $0x60] sm:$0xff]
      %v315 = vld [vmem:[%s223 + $0x68] sm:$0xff]
      %v316 = vld [vmem:[%s223 + $0x70] sm:$0xff]
      %v317 = vld [vmem:[%s223 + $0x78] sm:$0xff]
      %v318 = vld [vmem:[%s223 + $0x80] sm:$0xff]
      %v319 = vld [vmem:[%s223 + $0x88] sm:$0xff]
      %v320 = vld [vmem:[%s223 + $0x90] sm:$0xff]
      %v321 = vld [vmem:[%s223 + $0x98] sm:$0xff]
      %v322 = vld [vmem:[%s223 + $0xa0] sm:$0xff]
      %v323 = vld [vmem:[%s223 + $0xa8] sm:$0xff]
      %v324 = vld [vmem:[%s223 + $0xb0] sm:$0xff]
      %v325 = vld [vmem:[%s223 + $0xb8] sm:$0xff]
      %v326 = vld [vmem:[%s223 + $0xc0] sm:$0xff]
      %v327 = vld [vmem:[%s223 + $0xc8] sm:$0xff]
      %v328 = vld [vmem:[%s223 + $0xd0] sm:$0xff]
      %v329 = vld [vmem:[%s223 + $0xd8] sm:$0xff]
      %v330 = vld [vmem:[%s223 + $0xe0] sm:$0xff]
      %v331 = vld [vmem:[%s223 + $0xe8] sm:$0xff]
      %v332 = vld [vmem:[%s223 + $0xf0] sm:$0xff]
      %v333 = vld [vmem:[%s223 + $0xf8] sm:$0xff]
      %334 = vmatprep.subr.mxu0 0.0
      %335 = vmatpush1.msra.mxu0 %v254
      %336 = vmatprep.subr.mxu0 0.0
      %337 = vmatpush1.msra.mxu0 %v255
      %338 = vmatprep.subr.mxu0 0.0
      %339 = vmatpush1.msra.mxu0 %v256
      %340 = vmatprep.subr.mxu0 0.0
      %341 = vmatpush1.msra.mxu0 %v257
      %342 = vmatprep.subr.mxu0 0.0
      %343 = vmatpush1.msra.mxu0 %v258
      %344 = vmatprep.subr.mxu0 0.0
      %345 = vmatpush1.msra.mxu0 %v259
      %346 = vmatprep.subr.mxu0 0.0
      %347 = vmatpush1.msra.mxu0 %v260
      %348 = vmatprep.subr.mxu0 0.0
      %349 = vmatpush1.msra.mxu0 %v261
      %350 = vmatprep.subr.mxu0 0.0
      %351 = vmatpush1.msra.mxu0 %v262
      %352 = vmatprep.subr.mxu0 0.0
      %353 = vmatpush1.msra.mxu0 %v263
      %354 = vmatprep.subr.mxu0 0.0
      %355 = vmatpush1.msra.mxu0 %v264
      %356 = vmatprep.subr.mxu0 0.0
      %357 = vmatpush1.msra.mxu0 %v265
      %358 = vmatprep.subr.mxu0 0.0
      %359 = vmatpush1.msra.mxu0 %v266
      %360 = vmatprep.subr.mxu0 0.0
      %361 = vmatpush1.msra.mxu0 %v267
      %362 = vmatprep.subr.mxu0 0.0
      %363 = vmatpush1.msra.mxu0 %v268
      %364 = vmatprep.subr.mxu0 0.0
      %365 = vmatpush1.msra.mxu0 %v269
      %366 = vmatprep.subr.mxu0 0.0
      %367 = vmatpush1.msra.mxu0 %v270
      %368 = vmatprep.subr.mxu0 0.0
      %369 = vmatpush1.msra.mxu0 %v271
      %370 = vmatprep.subr.mxu0 0.0
      %371 = vmatpush1.msra.mxu0 %v272
      %372 = vmatprep.subr.mxu0 0.0
      %373 = vmatpush1.msra.mxu0 %v273
      %374 = vmatprep.subr.mxu0 0.0
      %375 = vmatpush1.msra.mxu0 %v274
      %376 = vmatprep.subr.mxu0 0.0
      %377 = vmatpush1.msra.mxu0 %v275
      %378 = vmatprep.subr.mxu0 0.0
      %379 = vmatpush1.msra.mxu0 %v276
      %380 = vmatprep.subr.mxu0 0.0
      %381 = vmatpush1.msra.mxu0 %v277
      %382 = vmatprep.subr.mxu0 0.0
      %383 = vmatpush1.msra.mxu0 %v278
      %384 = vmatprep.subr.mxu0 0.0
      %385 = vmatpush1.msra.mxu0 %v279
      %386 = vmatprep.subr.mxu0 0.0
      %387 = vmatpush1.msra.mxu0 %v280
      %388 = vmatprep.subr.mxu0 0.0
      %389 = vmatpush1.msra.mxu0 %v281
      %390 = vmatprep.subr.mxu0 0.0
      %391 = vmatpush1.msra.mxu0 %v282
      %392 = vmatprep.subr.mxu0 0.0
      %393 = vmatpush1.msra.mxu0 %v283
      %394 = vmatprep.subr.mxu0 0.0
      %395 = vmatpush1.msra.mxu0 %v284
      %396 = vmatprep.subr.mxu0 0.0
      %397 = vmatpush1.msra.mxu0 %v285
      %398 = vmatprep.mubr.f32.mxu0 %v303
      %399 = vmatmul.mubr.f32.gmra.mrb[0].mxu0 %v302
      %v400 = vpop.f32.mrb[0].mxu0
      %v401 = vadd.f32 0.0, %v400
      %v402 = vpop.f32.mrb[0].mxu0
      %403 = vmatprep.mubr.f32.mxu0 %v305
      %404 = vmatmul.mubr.f32.gmra.mrb[0].mxu0 %v304
      %v405 = vpop.f32.mrb[0].mxu0
      %v406 = vadd.f32 0.0, %v405
      %v407 = vpop.f32.mrb[0].mxu0
      %408 = vmatprep.mubr.f32.mxu0 %v307
      %409 = vmatmul.mubr.f32.gmra.mrb[0].mxu0 %v306
      %v410 = vpop.f32.mrb[0].mxu0
      %v411 = vadd.f32 0.0, %v410
      %v412 = vpop.f32.mrb[0].mxu0
      %413 = vmatprep.mubr.f32.mxu0 %v309
      %414 = vmatmul.mubr.f32.gmra.mrb[0].mxu0 %v308
      %v415 = vpop.f32.mrb[0].mxu0
      %v416 = vadd.f32 0.0, %v415
      %v417 = vpop.f32.mrb[0].mxu0
      %418 = vmatprep.mubr.f32.mxu0 %v311
      %419 = vmatmul.mubr.f32.gmra.mrb[0].mxu0 %v310
      %v420 = vpop.f32.mrb[0].mxu0
      %v421 = vadd.f32 0.0, %v420
      %v422 = vpop.f32.mrb[0].mxu0
      %423 = vmatprep.mubr.f32.mxu0 %v313
      %424 = vmatmul.mubr.f32.gmra.mrb[0].mxu0 %v312
      %v425 = vpop.f32.mrb[0].mxu0
      %v426 = vadd.f32 0.0, %v425
      %v427 = vpop.f32.mrb[0].mxu0
      %428 = vmatprep.mubr.f32.mxu0 %v315
      %429 = vmatmul.mubr.f32.gmra.mrb[0].mxu0 %v314
      %v430 = vpop.f32.mrb[0].mxu0
      %v431 = vadd.f32 0.0, %v430
      %v432 = vpop.f32.mrb[0].mxu0
      %433 = vmatprep.mubr.f32.mxu0 %v317
      %434 = vmatmul.mubr.f32.gmra.mrb[0].mxu0 %v316
      %v435 = vpop.f32.mrb[0].mxu0
      %v436 = vadd.f32 0.0, %v435
      %v437 = vpop.f32.mrb[0].mxu0
      %438 = vmatprep.mubr.f32.mxu0 %v319
      %439 = vmatmul.mubr.f32.gmra.mrb[0].mxu0 %v318
      %v440 = vpop.f32.mrb[0].mxu0
      %v441 = vadd.f32 0.0, %v440
      %v442 = vpop.f32.mrb[0].mxu0
      %443 = vmatprep.mubr.f32.mxu0 %v321
      %444 = vmatmul.mubr.f32.gmra.mrb[0].mxu0 %v320
      %v445 = vpop.f32.mrb[0].mxu0
      %v446 = vadd.f32 0.0, %v445
      %v447 = vpop.f32.mrb[0].mxu0
      %448 = vmatprep.mubr.f32.mxu0 %v323
      %449 = vmatmul.mubr.f32.gmra.mrb[0].mxu0 %v322
      %v450 = vpop.f32.mrb[0].mxu0
      %v451 = vadd.f32 0.0, %v450
      %v452 = vpop.f32.mrb[0].mxu0
      %453 = vmatprep.mubr.f32.mxu0 %v325
      %454 = vmatmul.mubr.f32.gmra.mrb[0].mxu0 %v324
      %v455 = vpop.f32.mrb[0].mxu0
      %v456 = vadd.f32 0.0, %v455
      %v457 = vpop.f32.mrb[0].mxu0
      %458 = vmatprep.mubr.f32.mxu0 %v327
      %459 = vmatmul.mubr.f32.gmra.mrb[0].mxu0 %v326
      %v460 = vpop.f32.mrb[0].mxu0
      %v461 = vadd.f32 0.0, %v460
      %v462 = vpop.f32.mrb[0].mxu0
      %463 = vmatprep.mubr.f32.mxu0 %v329
      %464 = vmatmul.mubr.f32.gmra.mrb[0].mxu0 %v328
      %v465 = vpop.f32.mrb[0].mxu0
      %v466 = vadd.f32 0.0, %v465
      %v467 = vpop.f32.mrb[0].mxu0
      %468 = vmatprep.mubr.f32.mxu0 %v331
      %469 = vmatmul.mubr.f32.gmra.mrb[0].mxu0 %v330
      %v470 = vpop.f32.mrb[0].mxu0
      %v471 = vadd.f32 0.0, %v470
      %v472 = vpop.f32.mrb[0].mxu0
      %473 = vmatprep.mubr.f32.mxu0 %v333
      %474 = vmatmul.mubr.f32.gmra.mrb[0].mxu0 %v332
      %v475 = vpop.f32.mrb[0].mxu0
      %v476 = vadd.f32 0.0, %v475
      %v477 = vpop.f32.mrb[0].mxu0
      %478 = vdwg.mxu0
      %v479 = vadd.f32 %v286, %v401
      %v480 = vadd.f32 %v287, %v406
      %v481 = vadd.f32 %v288, %v411
      %v482 = vadd.f32 %v289, %v416
      %v483 = vadd.f32 %v290, %v421
      %v484 = vadd.f32 %v291, %v426
      %v485 = vadd.f32 %v292, %v431
      %v486 = vadd.f32 %v293, %v436
      %v487 = vadd.f32 %v294, %v441
      %v488 = vadd.f32 %v295, %v446
      %v489 = vadd.f32 %v296, %v451
      %v490 = vadd.f32 %v297, %v456
      %v491 = vadd.f32 %v298, %v461
      %v492 = vadd.f32 %v299, %v466
      %v493 = vadd.f32 %v300, %v471
      %v494 = vadd.f32 %v301, %v476
      %495 = vst [vmem:[#allocation2] sm:$0xff] %v479
      %496 = vst [vmem:[#allocation2 + $0x8] sm:$0xff] %v480
      %497 = vst [vmem:[#allocation2 + $0x10] sm:$0xff] %v481
      %498 = vst [vmem:[#allocation2 + $0x18] sm:$0xff] %v482
      %499 = vst [vmem:[#allocation2 + $0x20] sm:$0xff] %v483
      %500 = vst [vmem:[#allocation2 + $0x28] sm:$0xff] %v484
      %501 = vst [vmem:[#allocation2 + $0x30] sm:$0xff] %v485
      %502 = vst [vmem:[#allocation2 + $0x38] sm:$0xff] %v486
      %503 = vst [vmem:[#allocation2 + $0x40] sm:$0xff] %v487
      %504 = vst [vmem:[#allocation2 + $0x48] sm:$0xff] %v488
      %505 = vst [vmem:[#allocation2 + $0x50] sm:$0xff] %v489
      %506 = vst [vmem:[#allocation2 + $0x58] sm:$0xff] %v490
      %507 = vst [vmem:[#allocation2 + $0x60] sm:$0xff] %v491
      %508 = vst [vmem:[#allocation2 + $0x68] sm:$0xff] %v492
      %509 = vst [vmem:[#allocation2 + $0x70] sm:$0xff] %v493
      %510 = vst [vmem:[#allocation2 + $0x78] sm:$0xff] %v494
      // Predicated region
      $region41: #{gcn_forward.5} parent=35 // pred_check
        %p511 = pneg %p232
      $region42: #{gcn_forward.5} parent=35 // pred_check_branch
        %513 = sbr.rel (%p511) target = $region44
      $region43: #{gcn_forward.5} parent=35 // pred_region
        %v514 = vld [vmem:[#allocation2] sm:$0xff]
        %v515 = vld [vmem:[#allocation2 + $0x8] sm:$0xff]
        %v516 = vld [vmem:[#allocation2 + $0x10] sm:$0xff]
        %v517 = vld [vmem:[#allocation2 + $0x18] sm:$0xff]
        %v518 = vld [vmem:[#allocation2 + $0x20] sm:$0xff]
        %v519 = vld [vmem:[#allocation2 + $0x28] sm:$0xff]
        %v520 = vld [vmem:[#allocation2 + $0x30] sm:$0xff]
        %v521 = vld [vmem:[#allocation2 + $0x38] sm:$0xff]
        %v522 = vld [vmem:[#allocation2 + $0x40] sm:$0xff]
        %v523 = vld [vmem:[#allocation2 + $0x48] sm:$0xff]
        %v524 = vld [vmem:[#allocation2 + $0x50] sm:$0xff]
        %v525 = vld [vmem:[#allocation2 + $0x58] sm:$0xff]
        %v526 = vld [vmem:[#allocation2 + $0x60] sm:$0xff]
        %v527 = vld [vmem:[#allocation2 + $0x68] sm:$0xff]
        %v528 = vld [vmem:[#allocation2 + $0x70] sm:$0xff]
        %v529 = vld [vmem:[#allocation2 + $0x78] sm:$0xff]
        %v530 = vld [vmem:[%s2] sm:$0x1]
        %v532 = vlaneseq
        %v533 = vshrl.u32 %v532, 7
        %v534 = vsub.s32 0, %v533
        %v535 = vrot.slane %v530, %v534
        %v537 = vadd.f32 %v514, %v535
        %v538 = vadd.f32 %v515, %v535
        %v539 = vadd.f32 %v516, %v535
        %v540 = vadd.f32 %v517, %v535
        %v541 = vadd.f32 %v518, %v535
        %v542 = vadd.f32 %v519, %v535
        %v543 = vadd.f32 %v520, %v535
        %v544 = vadd.f32 %v521, %v535
        %v545 = vadd.f32 %v522, %v535
        %v546 = vadd.f32 %v523, %v535
        %v547 = vadd.f32 %v524, %v535
        %v548 = vadd.f32 %v525, %v535
        %v549 = vadd.f32 %v526, %v535
        %v550 = vadd.f32 %v527, %v535
        %v551 = vadd.f32 %v528, %v535
        %v552 = vadd.f32 %v529, %v535
        %v553 = vmax.f32 %v537, 0.0
        %v554 = vmax.f32 %v538, 0.0
        %v555 = vmax.f32 %v539, 0.0
        %v556 = vmax.f32 %v540, 0.0
        %v557 = vmax.f32 %v541, 0.0
        %v558 = vmax.f32 %v542, 0.0
        %v559 = vmax.f32 %v543, 0.0
        %v560 = vmax.f32 %v544, 0.0
        %v561 = vmax.f32 %v545, 0.0
        %v562 = vmax.f32 %v546, 0.0
        %v563 = vmax.f32 %v547, 0.0
        %v564 = vmax.f32 %v548, 0.0
        %v565 = vmax.f32 %v549, 0.0
        %v566 = vmax.f32 %v550, 0.0
        %v567 = vmax.f32 %v551, 0.0
        %v568 = vmax.f32 %v552, 0.0
        %v569 = vld [vmem:[%s3] sm:$0xff]
        %v570 = vld [vmem:[%s3 + $0x8] sm:$0xff]
        %v571 = vld [vmem:[%s3 + $0x10] sm:$0xff]
        %v572 = vld [vmem:[%s3 + $0x18] sm:$0xff]
        %v573 = vld [vmem:[%s3 + $0x20] sm:$0xff]
        %v574 = vld [vmem:[%s3 + $0x28] sm:$0xff]
        %v575 = vld [vmem:[%s3 + $0x30] sm:$0xff]
        %v576 = vld [vmem:[%s3 + $0x38] sm:$0xff]
        %v577 = vld [vmem:[%s3 + $0x40] sm:$0xff]
        %v578 = vld [vmem:[%s3 + $0x48] sm:$0xff]
        %v579 = vld [vmem:[%s3 + $0x50] sm:$0xff]
        %v580 = vld [vmem:[%s3 + $0x58] sm:$0xff]
        %v581 = vld [vmem:[%s3 + $0x60] sm:$0xff]
        %v582 = vld [vmem:[%s3 + $0x68] sm:$0xff]
        %v583 = vld [vmem:[%s3 + $0x70] sm:$0xff]
        %v584 = vld [vmem:[%s3 + $0x78] sm:$0xff]
        %585 = vmatprep.subr.mxu0 0.0
        %586 = vmatpush1.msra.mxu0 %v569
        %587 = vmatprep.subr.mxu0 0.0
        %588 = vmatpush1.msra.mxu0 %v570
        %589 = vmatprep.subr.mxu0 0.0
        %590 = vmatpush1.msra.mxu0 %v571
        %591 = vmatprep.subr.mxu0 0.0
        %592 = vmatpush1.msra.mxu0 %v572
        %593 = vmatprep.subr.mxu0 0.0
        %594 = vmatpush1.msra.mxu0 %v573
        %595 = vmatprep.subr.mxu0 0.0
        %596 = vmatpush1.msra.mxu0 %v574
        %597 = vmatprep.subr.mxu0 0.0
        %598 = vmatpush1.msra.mxu0 %v575
        %599 = vmatprep.subr.mxu0 0.0
        %600 = vmatpush1.msra.mxu0 %v576
        %601 = vmatprep.subr.mxu0 0.0
        %602 = vmatpush1.msra.mxu0 %v577
        %603 = vmatprep.subr.mxu0 0.0
        %604 = vmatpush1.msra.mxu0 %v578
        %605 = vmatprep.subr.mxu0 0.0
        %606 = vmatpush1.msra.mxu0 %v579
        %607 = vmatprep.subr.mxu0 0.0
        %608 = vmatpush1.msra.mxu0 %v580
        %609 = vmatprep.subr.mxu0 0.0
        %610 = vmatpush1.msra.mxu0 %v581
        %611 = vmatprep.subr.mxu0 0.0
        %612 = vmatpush1.msra.mxu0 %v582
        %613 = vmatprep.subr.mxu0 0.0
        %614 = vmatpush1.msra.mxu0 %v583
        %615 = vmatprep.subr.mxu0 0.0
        %616 = vmatpush1.msra.mxu0 %v584
        %617 = vmatprep.subr.mxu0 0.0
        %618 = vmatpush1.msra.mxu0 0.0
        %619 = vmatprep.subr.mxu0 0.0
        %620 = vmatpush1.msra.mxu0 0.0
        %621 = vmatprep.subr.mxu0 0.0
        %622 = vmatpush1.msra.mxu0 0.0
        %623 = vmatprep.subr.mxu0 0.0
        %624 = vmatpush1.msra.mxu0 0.0
        %625 = vmatprep.subr.mxu0 0.0
        %626 = vmatpush1.msra.mxu0 0.0
        %627 = vmatprep.subr.mxu0 0.0
        %628 = vmatpush1.msra.mxu0 0.0
        %629 = vmatprep.subr.mxu0 0.0
        %630 = vmatpush1.msra.mxu0 0.0
        %631 = vmatprep.subr.mxu0 0.0
        %632 = vmatpush1.msra.mxu0 0.0
        %633 = vmatprep.subr.mxu0 0.0
        %634 = vmatpush1.msra.mxu0 0.0
        %635 = vmatprep.subr.mxu0 0.0
        %636 = vmatpush1.msra.mxu0 0.0
        %637 = vmatprep.subr.mxu0 0.0
        %638 = vmatpush1.msra.mxu0 0.0
        %639 = vmatprep.subr.mxu0 0.0
        %640 = vmatpush1.msra.mxu0 0.0
        %641 = vmatprep.subr.mxu0 0.0
        %642 = vmatpush1.msra.mxu0 0.0
        %643 = vmatprep.subr.mxu0 0.0
        %644 = vmatpush1.msra.mxu0 0.0
        %645 = vmatprep.subr.mxu0 0.0
        %646 = vmatpush1.msra.mxu0 0.0
        %647 = vmatprep.subr.mxu0 0.0
        %648 = vmatpush1.msra.mxu0 0.0
        %649 = vmatprep.mubr.f32.mxu0 0.0
        %650 = vmatmul.mubr.f32.gmra.mrb[0].mxu0 %v553
        %v651 = vpop.f32.mrb[0].mxu0
        %v652 = vadd.f32 0.0, %v651
        %v653 = vpop.f32.mrb[0].mxu0
        %654 = vmatprep.mubr.f32.mxu0 0.0
        %655 = vmatmul.mubr.f32.gmra.mrb[0].mxu0 %v554
        %v656 = vpop.f32.mrb[0].mxu0
        %v657 = vadd.f32 0.0, %v656
        %v658 = vpop.f32.mrb[0].mxu0
        %659 = vmatprep.mubr.f32.mxu0 0.0
        %660 = vmatmul.mubr.f32.gmra.mrb[0].mxu0 %v555
        %v661 = vpop.f32.mrb[0].mxu0
        %v662 = vadd.f32 0.0, %v661
        %v663 = vpop.f32.mrb[0].mxu0
        %664 = vmatprep.mubr.f32.mxu0 0.0
        %665 = vmatmul.mubr.f32.gmra.mrb[0].mxu0 %v556
        %v666 = vpop.f32.mrb[0].mxu0
        %v667 = vadd.f32 0.0, %v666
        %v668 = vpop.f32.mrb[0].mxu0
        %669 = vmatprep.mubr.f32.mxu0 0.0
        %670 = vmatmul.mubr.f32.gmra.mrb[0].mxu0 %v557
        %v671 = vpop.f32.mrb[0].mxu0
        %v672 = vadd.f32 0.0, %v671
        %v673 = vpop.f32.mrb[0].mxu0
        %674 = vmatprep.mubr.f32.mxu0 0.0
        %675 = vmatmul.mubr.f32.gmra.mrb[0].mxu0 %v558
        %v676 = vpop.f32.mrb[0].mxu0
        %v677 = vadd.f32 0.0, %v676
        %v678 = vpop.f32.mrb[0].mxu0
        %679 = vmatprep.mubr.f32.mxu0 0.0
        %680 = vmatmul.mubr.f32.gmra.mrb[0].mxu0 %v559
        %v681 = vpop.f32.mrb[0].mxu0
        %v682 = vadd.f32 0.0, %v681
        %v683 = vpop.f32.mrb[0].mxu0
        %684 = vmatprep.mubr.f32.mxu0 0.0
        %685 = vmatmul.mubr.f32.gmra.mrb[0].mxu0 %v560
        %v686 = vpop.f32.mrb[0].mxu0
        %v687 = vadd.f32 0.0, %v686
        %v688 = vpop.f32.mrb[0].mxu0
        %689 = vmatprep.mubr.f32.mxu0 0.0
        %690 = vmatmul.mubr.f32.gmra.mrb[0].mxu0 %v561
        %v691 = vpop.f32.mrb[0].mxu0
        %v692 = vadd.f32 0.0, %v691
        %v693 = vpop.f32.mrb[0].mxu0
        %694 = vmatprep.mubr.f32.mxu0 0.0
        %695 = vmatmul.mubr.f32.gmra.mrb[0].mxu0 %v562
        %v696 = vpop.f32.mrb[0].mxu0
        %v697 = vadd.f32 0.0, %v696
        %v698 = vpop.f32.mrb[0].mxu0
        %699 = vmatprep.mubr.f32.mxu0 0.0
        %700 = vmatmul.mubr.f32.gmra.mrb[0].mxu0 %v563
        %v701 = vpop.f32.mrb[0].mxu0
        %v702 = vadd.f32 0.0, %v701
        %v703 = vpop.f32.mrb[0].mxu0
        %704 = vmatprep.mubr.f32.mxu0 0.0
        %705 = vmatmul.mubr.f32.gmra.mrb[0].mxu0 %v564
        %v706 = vpop.f32.mrb[0].mxu0
        %v707 = vadd.f32 0.0, %v706
        %v708 = vpop.f32.mrb[0].mxu0
        %709 = vmatprep.mubr.f32.mxu0 0.0
        %710 = vmatmul.mubr.f32.gmra.mrb[0].mxu0 %v565
        %v711 = vpop.f32.mrb[0].mxu0
        %v712 = vadd.f32 0.0, %v711
        %v713 = vpop.f32.mrb[0].mxu0
        %714 = vmatprep.mubr.f32.mxu0 0.0
        %715 = vmatmul.mubr.f32.gmra.mrb[0].mxu0 %v566
        %v716 = vpop.f32.mrb[0].mxu0
        %v717 = vadd.f32 0.0, %v716
        %v718 = vpop.f32.mrb[0].mxu0
        %719 = vmatprep.mubr.f32.mxu0 0.0
        %720 = vmatmul.mubr.f32.gmra.mrb[0].mxu0 %v567
        %v721 = vpop.f32.mrb[0].mxu0
        %v722 = vadd.f32 0.0, %v721
        %v723 = vpop.f32.mrb[0].mxu0
        %724 = vmatprep.mubr.f32.mxu0 0.0
        %725 = vmatmul.mubr.f32.gmra.mrb[0].mxu0 %v568
        %v726 = vpop.f32.mrb[0].mxu0
        %v727 = vadd.f32 0.0, %v726
        %v728 = vpop.f32.mrb[0].mxu0
        %729 = vdwg.mxu0
        %730 = vst [vmem:[%s230] sm:$0xff] %v652
        %731 = vst [vmem:[%s230 + $0x8] sm:$0xff] %v657
        %732 = vst [vmem:[%s230 + $0x10] sm:$0xff] %v662
        %733 = vst [vmem:[%s230 + $0x18] sm:$0xff] %v667
        %734 = vst [vmem:[%s230 + $0x20] sm:$0xff] %v672
        %735 = vst [vmem:[%s230 + $0x28] sm:$0xff] %v677
        %736 = vst [vmem:[%s230 + $0x30] sm:$0xff] %v682
        %737 = vst [vmem:[%s230 + $0x38] sm:$0xff] %v687
        %738 = vst [vmem:[%s230 + $0x40] sm:$0xff] %v692
        %739 = vst [vmem:[%s230 + $0x48] sm:$0xff] %v697
        %740 = vst [vmem:[%s230 + $0x50] sm:$0xff] %v702
        %741 = vst [vmem:[%s230 + $0x58] sm:$0xff] %v707
        %742 = vst [vmem:[%s230 + $0x60] sm:$0xff] %v712
        %743 = vst [vmem:[%s230 + $0x68] sm:$0xff] %v717
        %744 = vst [vmem:[%s230 + $0x70] sm:$0xff] %v722
        %745 = vst [vmem:[%s230 + $0x78] sm:$0xff] %v727
      $region44: #{gcn_forward.5} parent=35 // pred_fallthru
        _
      %s746 = smul.u32 16, %s19
      %p747 = scmp.lt.s32.totalorder %s746, 31
      %s748 = scalar_select %p747, %s746, 31
      %s749 = smul.addr %s748, 8
      %s750 = scalar_lea.vmem %s4, %s749
      // Predicated region
      $region45: #{gcn_forward.5} parent=35 // pred_check
        %p751 = pneg %p136
      $region46: #{gcn_forward.5} parent=35 // pred_check_branch
        %753 = sbr.rel (%p751) target = $region48
      $region47: #{gcn_forward.5} parent=35 // pred_region
        %s754 = smul.u32 16, %s19
      $region48: #{gcn_forward.5} parent=35 // pred_fallthru
        _
    $region36: #{gcn_forward.5} parent=5 // pred_fallthru
      _
    %p755 = scmp.le.s32.totalorder 2, %s10
    // Predicated region
    $region49: #{gcn_forward.5} parent=5 // pred_check
      %p756 = pneg %p755
    $region50: #{gcn_forward.5} parent=5 // pred_check_branch
      %758 = sbr.rel (%p756) target = $region52
    $region51: #{gcn_forward.5} parent=5 // pred_region
      %s759 = ssub.s32 %s10, 2
      // Predicated region
      $region53: #{gcn_forward.5} parent=51 // pred_check
        %p760 = pneg %p142
      $region54: #{gcn_forward.5} parent=51 // pred_check_branch
        %762 = sbr.rel (%p760) target = $region56
      $region55: #{gcn_forward.5} parent=51 // pred_region
        %s763 = smul.u32 16, %s21
        %p764 = scmp.lt.s32.totalorder %s763, 31
        %s765 = scalar_select %p764, %s763, 31
        %s766 = smul.addr %s765, 8
        %s767 = scalar_lea.vmem %s4, %s766
      $region56: #{gcn_forward.5} parent=51 // pred_fallthru
        _
    $region52: #{gcn_forward.5} parent=5 // pred_fallthru
      _
  $region6: #{gcn_forward.5} parent=0 // loop_footer
    %s14 = sadd.s32 1, %s10
  $region7: #{gcn_forward.5} parent=0 // loop_footer_branch
    %9 = sbr.rel target = $region3
  $region8: #{gcn_forward.5} parent=0 // loop_exit
    _

// kernel: gcn_forward.7
$region0: #{gcn_forward.7}
  #allocation0 [shape = 'u32[]', space=smem, size = 0x4, offset = 0x4, fixed_abs, tag = 'smem constant byte address 0x4 - core index']
  #allocation1 [shape = 'u32[144,128]{1,0:T(1,128)}', space=vmem, size = 0x12000, scoped, tag = 'internal scratch']
  #allocation2 [shape = 'f32[128,128]{1,0:T(8,128)}', space=vmem, size = 0x10000, scoped, tag = 'scratch operand']
  %s0 = inlined_call_operand.vmem [shape: f32[256,256], index: 0, kind: input, shape index: {}]
  %s1 = inlined_call_operand.vmem [shape: f32[256,128], index: 1, kind: input, shape index: {}]
  %s2 = inlined_call_operand.vmem [shape: f32[1,128], index: 2, kind: input, shape index: {}]
  %s3 = inlined_call_operand.vmem [shape: f32[256,128], index: 3, kind: output, shape index: {}]
  %s4 = sld [smem:[#allocation0]]
  $region53: #{gcn_forward.7} parent=0
    _
  %s6 = ssub.s32 1, %s4
  %s7 = scalar_select 0, %s6, %s4
  loop: start=0, step=1, limit=4
  $region2: #{gcn_forward.7} parent=0 // loop_pre_header
    _
  $region3: #{gcn_forward.7} parent=0 // loop_header
    %s9 = sphi 0, %s13
    %p10 = scmp.ge.s32.totalorder %s9, 4
    %s16 = sphi 0, %s28
    %s17 = sphi 0, %s24
    %s18 = sphi 0, %s16
    %s19 = sphi 0, %s17
    %s20 = sphi 0, %s18
    %s21 = sphi 0, %s19
    %s33 = sphi 0, %s35
    %s36 = sphi 0, %s33
    %s37 = sphi 0, %s36
    %s53 = sphi 0, %s37
    %s57 = sphi 0, %s57
    %s59 = sphi 0, %s57
    %s60 = sphi 0, %s59
    %s74 = sphi 0, %s60
    %s78 = sphi 0, %s78
    %s80 = sphi 0, %s78
    %s81 = sphi 0, %s80
    %s95 = sphi 0, %s81
    %s101 = sphi 0, %s103
    %s104 = sphi 0, %s101
    %s105 = sphi 0, %s104
    %s121 = sphi 0, %s105
  $region4: #{gcn_forward.7} parent=0 // loop_header_branch
    %12 = sbr.rel (%p10) target = $region8
  $region5: #{gcn_forward.7} parent=0 // loop_body
    %s14 = ssub.s32 %s9, 1
    %s15 = ssub.s32 %s9, 2
    %s22 = sadd.s32 1, %s17
    %p23 = scmp.ge.s32.totalorder %s22, 1
    %s24 = scalar_select %p23, 0, %s22
    %s25 = sadd.s32 1, %s16
    %s26 = scalar_select %p23, %s25, %s16
    %p27 = scmp.ge.s32.totalorder %s26, 2
    %s28 = scalar_select %p27, 0, %s26
    %s29 = ssub.s32 %s16, %s28
    %s30 = ssub.s32 %s17, %s24
    %s31 = sor.u32 %s29, %s30
    %p32 = scmp.eq.s32.totalorder %s31, 0
    %s34 = sadd.s32 %s33, 1
    %s35 = scalar_select %p32, %s33, %s34
    %p38 = pneg %p32
    %p39 = scmp.eq.s32.totalorder %s9, 1
    %p40 = por %p38, %p39
    %p41 = scmp.ne.s32.totalorder %s33, %s36
    %p42 = scmp.eq.s32.totalorder %s9, 0
    %p43 = por %p41, %p42
    %p44 = scmp.ne.s32.totalorder %s33, %s36
    %p45 = scmp.eq.s32.totalorder %s14, 1
    %p46 = por %p44, %p45
    %p47 = scmp.ne.s32.totalorder %s36, %s37
    %p48 = scmp.eq.s32.totalorder %s14, 0
    %p49 = por %p47, %p48
    %p50 = scmp.ne.s32.totalorder %s36, %s37
    %p51 = scmp.eq.s32.totalorder %s15, 1
    %p52 = por %p50, %p51
    %p54 = scmp.ne.s32.totalorder %s37, %s53
    %p55 = scmp.eq.s32.totalorder %s15, 0
    %p56 = por %p54, %p55
    %s58 = sadd.s32 %s57, 1
    %p61 = scmp.eq.s32.totalorder %s9, 1
    %p62 = scmp.ne.s32.totalorder %s57, %s59
    %p63 = scmp.eq.s32.totalorder %s9, 0
    %p64 = por %p62, %p63
    %p65 = scmp.ne.s32.totalorder %s57, %s59
    %p66 = scmp.eq.s32.totalorder %s14, 1
    %p67 = por %p65, %p66
    %p68 = scmp.ne.s32.totalorder %s59, %s60
    %p69 = scmp.eq.s32.totalorder %s14, 0
    %p70 = por %p68, %p69
    %p71 = scmp.ne.s32.totalorder %s59, %s60
    %p72 = scmp.eq.s32.totalorder %s15, 1
    %p73 = por %p71, %p72
    %p75 = scmp.ne.s32.totalorder %s60, %s74
    %p76 = scmp.eq.s32.totalorder %s15, 0
    %p77 = por %p75, %p76
    %s79 = sadd.s32 %s78, 1
    %p82 = scmp.eq.s32.totalorder %s9, 1
    %p83 = scmp.ne.s32.totalorder %s78, %s80
    %p84 = scmp.eq.s32.totalorder %s9, 0
    %p85 = por %p83, %p84
    %p86 = scmp.ne.s32.totalorder %s78, %s80
    %p87 = scmp.eq.s32.totalorder %s14, 1
    %p88 = por %p86, %p87
    %p89 = scmp.ne.s32.totalorder %s80, %s81
    %p90 = scmp.eq.s32.totalorder %s14, 0
    %p91 = por %p89, %p90
    %p92 = scmp.ne.s32.totalorder %s80, %s81
    %p93 = scmp.eq.s32.totalorder %s15, 1
    %p94 = por %p92, %p93
    %p96 = scmp.ne.s32.totalorder %s81, %s95
    %p97 = scmp.eq.s32.totalorder %s15, 0
    %p98 = por %p96, %p97
    %s99 = ssub.s32 %s16, %s28
    %p100 = scmp.eq.s32.totalorder %s99, 0
    %s102 = sadd.s32 %s101, 1
    %s103 = scalar_select %p100, %s101, %s102
    %p106 = pneg %p100
    %p107 = scmp.eq.s32.totalorder %s9, 1
    %p108 = por %p106, %p107
    %p109 = scmp.ne.s32.totalorder %s101, %s104
    %p110 = scmp.eq.s32.totalorder %s9, 0
    %p111 = por %p109, %p110
    %p112 = scmp.ne.s32.totalorder %s101, %s104
    %p113 = scmp.eq.s32.totalorder %s14, 1
    %p114 = por %p112, %p113
    %p115 = scmp.ne.s32.totalorder %s104, %s105
    %p116 = scmp.eq.s32.totalorder %s14, 0
    %p117 = por %p115, %p116
    %p118 = scmp.ne.s32.totalorder %s104, %s105
    %p119 = scmp.eq.s32.totalorder %s15, 1
    %p120 = por %p118, %p119
    %p122 = scmp.ne.s32.totalorder %s105, %s121
    %p123 = scmp.eq.s32.totalorder %s15, 0
    %p124 = por %p122, %p123
    %p125 = scmp.le.s32.totalorder 1, %s9
    %p126 = scmp.lt.s32.totalorder %s9, 3
    %p127 = pnand %p125, %p126
    %p128 = pneg %p127
    // Predicated region
    $region9: #{gcn_forward.7} parent=5 // pred_check
      _
    $region10: #{gcn_forward.7} parent=5 // pred_check_branch
      %130 = sbr.rel (%p127) target = $region12
    $region11: #{gcn_forward.7} parent=5 // pred_region
      %s131 = ssub.s32 %s9, 1
      // Predicated region
      $region13: #{gcn_forward.7} parent=11 // pred_check
        %p132 = pneg %p70
      $region14: #{gcn_forward.7} parent=11 // pred_check_branch
        %134 = sbr.rel (%p132) target = $region16
      $region15: #{gcn_forward.7} parent=11 // pred_region
        _
      $region16: #{gcn_forward.7} parent=11 // pred_fallthru
        _
      // Predicated region
      $region17: #{gcn_forward.7} parent=11 // pred_check
        %p135 = pneg %p91
      $region18: #{gcn_forward.7} parent=11 // pred_check_branch
        %137 = sbr.rel (%p135) target = $region20
      $region19: #{gcn_forward.7} parent=11 // pred_region
        _
      $region20: #{gcn_forward.7} parent=11 // pred_fallthru
        _
    $region12: #{gcn_forward.7} parent=5 // pred_fallthru
      _
    %p138 = scmp.lt.s32.totalorder %s9, 2
    // Predicated region
    $region21: #{gcn_forward.7} parent=5 // pred_check
      %p139 = pneg %p138
    $region22: #{gcn_forward.7} parent=5 // pred_check_branch
      %141 = sbr.rel (%p139) target = $region24
    $region23: #{gcn_forward.7} parent=5 // pred_region
      // Predicated region
      $region25: #{gcn_forward.7} parent=23 // pred_check
        %p142 = pneg %p43
      $region26: #{gcn_forward.7} parent=23 // pred_check_branch
        %144 = sbr.rel (%p142) target = $region28
      $region27: #{gcn_forward.7} parent=23 // pred_region
        %s145 = smul.u32 16, %s16
        %s146 = smul.u32 2, %s17
        %p147 = scmp.lt.s32.totalorder %s145, 31
        %s148 = scalar_select %p147, %s145, 31
        %p149 = scmp.lt.s32.totalorder %s146, 1
        %s150 = scalar_select %p149, %s146, 1
        %s151 = smul.addr %s148, 2
        %s152 = sadd.s32 %s150, %s151
        %s153 = smul.addr %s152, 8
        %s154 = scalar_lea.vmem %s0, %s153
        %s155 = smul.u32 16, %s16
        %s156 = smul.u32 2, %s17
      $region28: #{gcn_forward.7} parent=23 // pred_fallthru
        _
    $region24: #{gcn_forward.7} parent=5 // pred_fallthru
      _
    %p157 = scmp.le.s32.totalorder 1, %s9
    %p158 = scmp.lt.s32.totalorder %s9, 3
    %p159 = pnand %p157, %p158
    %p160 = pneg %p159
    // Predicated region
    $region29: #{gcn_forward.7} parent=5 // pred_check
      _
    $region30: #{gcn_forward.7} parent=5 // pred_check_branch
      %162 = sbr.rel (%p159) target = $region32
    $region31: #{gcn_forward.7} parent=5 // pred_region
      %s163 = ssub.s32 %s9, 1
      %s164 = smul.u32 16, %s18
      %s165 = smul.u32 2, %s19
      %p166 = scmp.lt.s32.totalorder %s164, 31
      %s167 = scalar_select %p166, %s164, 31
      %p168 = scmp.lt.s32.totalorder %s165, 1
      %s169 = scalar_select %p168, %s165, 1
      %s170 = smul.addr %s167, 2
      %s171 = sadd.s32 %s169, %s170
      %s172 = smul.addr %s171, 8
      %s173 = scalar_lea.vmem %s0, %s172
      %p174 = pneg %p49
      %p175 = pneg %p46
      %p176 = pneg %p70
      %p177 = pneg %p67
      %p178 = pneg %p91
      %p179 = pneg %p88
      %p180 = pneg %p117
      %p181 = pneg %p114
      %s182 = smul.u32 16, %s18
      %p183 = scmp.lt.s32.totalorder %s182, 31
      %s184 = scalar_select %p183, %s182, 31
      %s185 = smul.addr %s184, 8
      %s186 = scalar_lea.vmem %s3, %s185
      %s187 = smul.u32 16, %s18
      %s188 = smul.u32 2, %s19
      %p189 = scmp.lt.s32.totalorder %s187, 31
      %s190 = scalar_select %p189, %s187, 31
      %p191 = scmp.lt.s32.totalorder %s188, 1
      %s192 = scalar_select %p191, %s188, 1
      %s193 = smul.addr %s190, 2
      %s194 = sadd.s32 %s192, %s193
      %s195 = smul.addr %s194, 8
      %s196 = scalar_lea.vmem %s0, %s195
      %s197 = smul.u32 16, %s18
      %s198 = smul.u32 2, %s19
      %s199 = smul.u32 16, %s18
      %p200 = scmp.lt.s32.totalorder %s199, 31
      %s201 = scalar_select %p200, %s199, 31
      %s202 = smul.addr %s201, 8
      %s203 = scalar_lea.vmem %s3, %s202
      %s204 = smul.u32 16, %s18
      %p205 = scmp.eq.s32.totalorder %s19, 0
      // Predicated region
      $region33: #{gcn_forward.7} parent=31 // pred_check
        %p206 = pneg %p205
      $region34: #{gcn_forward.7} parent=31 // pred_check_branch
        %208 = sbr.rel (%p206) target = $region36
      $region35: #{gcn_forward.7} parent=31 // pred_region
        %209 = vst [vmem:[#allocation2] sm:$0xff] 0.0
        %210 = vst [vmem:[#allocation2 + $0x8] sm:$0xff] 0.0
        %211 = vst [vmem:[#allocation2 + $0x10] sm:$0xff] 0.0
        %212 = vst [vmem:[#allocation2 + $0x18] sm:$0xff] 0.0
        %213 = vst [vmem:[#allocation2 + $0x20] sm:$0xff] 0.0
        %214 = vst [vmem:[#allocation2 + $0x28] sm:$0xff] 0.0
        %215 = vst [vmem:[#allocation2 + $0x30] sm:$0xff] 0.0
        %216 = vst [vmem:[#allocation2 + $0x38] sm:$0xff] 0.0
        %217 = vst [vmem:[#allocation2 + $0x40] sm:$0xff] 0.0
        %218 = vst [vmem:[#allocation2 + $0x48] sm:$0xff] 0.0
        %219 = vst [vmem:[#allocation2 + $0x50] sm:$0xff] 0.0
        %220 = vst [vmem:[#allocation2 + $0x58] sm:$0xff] 0.0
        %221 = vst [vmem:[#allocation2 + $0x60] sm:$0xff] 0.0
        %222 = vst [vmem:[#allocation2 + $0x68] sm:$0xff] 0.0
        %223 = vst [vmem:[#allocation2 + $0x70] sm:$0xff] 0.0
        %224 = vst [vmem:[#allocation2 + $0x78] sm:$0xff] 0.0
      $region36: #{gcn_forward.7} parent=31 // pred_fallthru
        _
      %s225 = smul.u32 %s19, 256
      %s226 = scalar_lea.vmem %s1, %s225
      %v227 = vld [vmem:[%s226] sm:$0xff]
      %v228 = vld [vmem:[%s226 + $0x8] sm:$0xff]
      %v229 = vld [vmem:[%s226 + $0x10] sm:$0xff]
      %v230 = vld [vmem:[%s226 + $0x18] sm:$0xff]
      %v231 = vld [vmem:[%s226 + $0x20] sm:$0xff]
      %v232 = vld [vmem:[%s226 + $0x28] sm:$0xff]
      %v233 = vld [vmem:[%s226 + $0x30] sm:$0xff]
      %v234 = vld [vmem:[%s226 + $0x38] sm:$0xff]
      %v235 = vld [vmem:[%s226 + $0x40] sm:$0xff]
      %v236 = vld [vmem:[%s226 + $0x48] sm:$0xff]
      %v237 = vld [vmem:[%s226 + $0x50] sm:$0xff]
      %v238 = vld [vmem:[%s226 + $0x58] sm:$0xff]
      %v239 = vld [vmem:[%s226 + $0x60] sm:$0xff]
      %v240 = vld [vmem:[%s226 + $0x68] sm:$0xff]
      %v241 = vld [vmem:[%s226 + $0x70] sm:$0xff]
      %v242 = vld [vmem:[%s226 + $0x78] sm:$0xff]
      %v243 = vld [vmem:[%s226 + $0x80] sm:$0xff]
      %v244 = vld [vmem:[%s226 + $0x88] sm:$0xff]
      %v245 = vld [vmem:[%s226 + $0x90] sm:$0xff]
      %v246 = vld [vmem:[%s226 + $0x98] sm:$0xff]
      %v247 = vld [vmem:[%s226 + $0xa0] sm:$0xff]
      %v248 = vld [vmem:[%s226 + $0xa8] sm:$0xff]
      %v249 = vld [vmem:[%s226 + $0xb0] sm:$0xff]
      %v250 = vld [vmem:[%s226 + $0xb8] sm:$0xff]
      %v251 = vld [vmem:[%s226 + $0xc0] sm:$0xff]
      %v252 = vld [vmem:[%s226 + $0xc8] sm:$0xff]
      %v253 = vld [vmem:[%s226 + $0xd0] sm:$0xff]
      %v254 = vld [vmem:[%s226 + $0xd8] sm:$0xff]
      %v255 = vld [vmem:[%s226 + $0xe0] sm:$0xff]
      %v256 = vld [vmem:[%s226 + $0xe8] sm:$0xff]
      %v257 = vld [vmem:[%s226 + $0xf0] sm:$0xff]
      %v258 = vld [vmem:[%s226 + $0xf8] sm:$0xff]
      %v259 = vld [vmem:[#allocation2] sm:$0xff]
      %v260 = vld [vmem:[#allocation2 + $0x8] sm:$0xff]
      %v261 = vld [vmem:[#allocation2 + $0x10] sm:$0xff]
      %v262 = vld [vmem:[#allocation2 + $0x18] sm:$0xff]
      %v263 = vld [vmem:[#allocation2 + $0x20] sm:$0xff]
      %v264 = vld [vmem:[#allocation2 + $0x28] sm:$0xff]
      %v265 = vld [vmem:[#allocation2 + $0x30] sm:$0xff]
      %v266 = vld [vmem:[#allocation2 + $0x38] sm:$0xff]
      %v267 = vld [vmem:[#allocation2 + $0x40] sm:$0xff]
      %v268 = vld [vmem:[#allocation2 + $0x48] sm:$0xff]
      %v269 = vld [vmem:[#allocation2 + $0x50] sm:$0xff]
      %v270 = vld [vmem:[#allocation2 + $0x58] sm:$0xff]
      %v271 = vld [vmem:[#allocation2 + $0x60] sm:$0xff]
      %v272 = vld [vmem:[#allocation2 + $0x68] sm:$0xff]
      %v273 = vld [vmem:[#allocation2 + $0x70] sm:$0xff]
      %v274 = vld [vmem:[#allocation2 + $0x78] sm:$0xff]
      %v275 = vld [vmem:[%s196] sm:$0xff]
      %v276 = vld [vmem:[%s196 + $0x8] sm:$0xff]
      %v277 = vld [vmem:[%s196 + $0x10] sm:$0xff]
      %v278 = vld [vmem:[%s196 + $0x18] sm:$0xff]
      %v279 = vld [vmem:[%s196 + $0x20] sm:$0xff]
      %v280 = vld [vmem:[%s196 + $0x28] sm:$0xff]
      %v281 = vld [vmem:[%s196 + $0x30] sm:$0xff]
      %v282 = vld [vmem:[%s196 + $0x38] sm:$0xff]
      %v283 = vld [vmem:[%s196 + $0x40] sm:$0xff]
      %v284 = vld [vmem:[%s196 + $0x48] sm:$0xff]
      %v285 = vld [vmem:[%s196 + $0x50] sm:$0xff]
      %v286 = vld [vmem:[%s196 + $0x58] sm:$0xff]
      %v287 = vld [vmem:[%s196 + $0x60] sm:$0xff]
      %v288 = vld [vmem:[%s196 + $0x68] sm:$0xff]
      %v289 = vld [vmem:[%s196 + $0x70] sm:$0xff]
      %v290 = vld [vmem:[%s196 + $0x78] sm:$0xff]
      %v291 = vld [vmem:[%s196 + $0x80] sm:$0xff]
      %v292 = vld [vmem:[%s196 + $0x88] sm:$0xff]
      %v293 = vld [vmem:[%s196 + $0x90] sm:$0xff]
      %v294 = vld [vmem:[%s196 + $0x98] sm:$0xff]
      %v295 = vld [vmem:[%s196 + $0xa0] sm:$0xff]
      %v296 = vld [vmem:[%s196 + $0xa8] sm:$0xff]
      %v297 = vld [vmem:[%s196 + $0xb0] sm:$0xff]
      %v298 = vld [vmem:[%s196 + $0xb8] sm:$0xff]
      %v299 = vld [vmem:[%s196 + $0xc0] sm:$0xff]
      %v300 = vld [vmem:[%s196 + $0xc8] sm:$0xff]
      %v301 = vld [vmem:[%s196 + $0xd0] sm:$0xff]
      %v302 = vld [vmem:[%s196 + $0xd8] sm:$0xff]
      %v303 = vld [vmem:[%s196 + $0xe0] sm:$0xff]
      %v304 = vld [vmem:[%s196 + $0xe8] sm:$0xff]
      %v305 = vld [vmem:[%s196 + $0xf0] sm:$0xff]
      %v306 = vld [vmem:[%s196 + $0xf8] sm:$0xff]
      %307 = vmatprep.subr.mxu0 0.0
      %308 = vmatpush1.msra.mxu0 %v227
      %309 = vmatprep.subr.mxu0 0.0
      %310 = vmatpush1.msra.mxu0 %v228
      %311 = vmatprep.subr.mxu0 0.0
      %312 = vmatpush1.msra.mxu0 %v229
      %313 = vmatprep.subr.mxu0 0.0
      %314 = vmatpush1.msra.mxu0 %v230
      %315 = vmatprep.subr.mxu0 0.0
      %316 = vmatpush1.msra.mxu0 %v231
      %317 = vmatprep.subr.mxu0 0.0
      %318 = vmatpush1.msra.mxu0 %v232
      %319 = vmatprep.subr.mxu0 0.0
      %320 = vmatpush1.msra.mxu0 %v233
      %321 = vmatprep.subr.mxu0 0.0
      %322 = vmatpush1.msra.mxu0 %v234
      %323 = vmatprep.subr.mxu0 0.0
      %324 = vmatpush1.msra.mxu0 %v235
      %325 = vmatprep.subr.mxu0 0.0
      %326 = vmatpush1.msra.mxu0 %v236
      %327 = vmatprep.subr.mxu0 0.0
      %328 = vmatpush1.msra.mxu0 %v237
      %329 = vmatprep.subr.mxu0 0.0
      %330 = vmatpush1.msra.mxu0 %v238
      %331 = vmatprep.subr.mxu0 0.0
      %332 = vmatpush1.msra.mxu0 %v239
      %333 = vmatprep.subr.mxu0 0.0
      %334 = vmatpush1.msra.mxu0 %v240
      %335 = vmatprep.subr.mxu0 0.0
      %336 = vmatpush1.msra.mxu0 %v241
      %337 = vmatprep.subr.mxu0 0.0
      %338 = vmatpush1.msra.mxu0 %v242
      %339 = vmatprep.subr.mxu0 0.0
      %340 = vmatpush1.msra.mxu0 %v243
      %341 = vmatprep.subr.mxu0 0.0
      %342 = vmatpush1.msra.mxu0 %v244
      %343 = vmatprep.subr.mxu0 0.0
      %344 = vmatpush1.msra.mxu0 %v245
      %345 = vmatprep.subr.mxu0 0.0
      %346 = vmatpush1.msra.mxu0 %v246
      %347 = vmatprep.subr.mxu0 0.0
      %348 = vmatpush1.msra.mxu0 %v247
      %349 = vmatprep.subr.mxu0 0.0
      %350 = vmatpush1.msra.mxu0 %v248
      %351 = vmatprep.subr.mxu0 0.0
      %352 = vmatpush1.msra.mxu0 %v249
      %353 = vmatprep.subr.mxu0 0.0
      %354 = vmatpush1.msra.mxu0 %v250
      %355 = vmatprep.subr.mxu0 0.0
      %356 = vmatpush1.msra.mxu0 %v251
      %357 = vmatprep.subr.mxu0 0.0
      %358 = vmatpush1.msra.mxu0 %v252
      %359 = vmatprep.subr.mxu0 0.0
      %360 = vmatpush1.msra.mxu0 %v253
      %361 = vmatprep.subr.mxu0 0.0
      %362 = vmatpush1.msra.mxu0 %v254
      %363 = vmatprep.subr.mxu0 0.0
      %364 = vmatpush1.msra.mxu0 %v255
      %365 = vmatprep.subr.mxu0 0.0
      %366 = vmatpush1.msra.mxu0 %v256
      %367 = vmatprep.subr.mxu0 0.0
      %368 = vmatpush1.msra.mxu0 %v257
      %369 = vmatprep.subr.mxu0 0.0
      %370 = vmatpush1.msra.mxu0 %v258
      %371 = vmatprep.mubr.f32.mxu0 %v276
      %372 = vmatmul.mubr.f32.gmra.mrb[0].mxu0 %v275
      %v373 = vpop.f32.mrb[0].mxu0
      %v374 = vadd.f32 0.0, %v373
      %v375 = vpop.f32.mrb[0].mxu0
      %376 = vmatprep.mubr.f32.mxu0 %v278
      %377 = vmatmul.mubr.f32.gmra.mrb[0].mxu0 %v277
      %v378 = vpop.f32.mrb[0].mxu0
      %v379 = vadd.f32 0.0, %v378
      %v380 = vpop.f32.mrb[0].mxu0
      %381 = vmatprep.mubr.f32.mxu0 %v280
      %382 = vmatmul.mubr.f32.gmra.mrb[0].mxu0 %v279
      %v383 = vpop.f32.mrb[0].mxu0
      %v384 = vadd.f32 0.0, %v383
      %v385 = vpop.f32.mrb[0].mxu0
      %386 = vmatprep.mubr.f32.mxu0 %v282
      %387 = vmatmul.mubr.f32.gmra.mrb[0].mxu0 %v281
      %v388 = vpop.f32.mrb[0].mxu0
      %v389 = vadd.f32 0.0, %v388
      %v390 = vpop.f32.mrb[0].mxu0
      %391 = vmatprep.mubr.f32.mxu0 %v284
      %392 = vmatmul.mubr.f32.gmra.mrb[0].mxu0 %v283
      %v393 = vpop.f32.mrb[0].mxu0
      %v394 = vadd.f32 0.0, %v393
      %v395 = vpop.f32.mrb[0].mxu0
      %396 = vmatprep.mubr.f32.mxu0 %v286
      %397 = vmatmul.mubr.f32.gmra.mrb[0].mxu0 %v285
      %v398 = vpop.f32.mrb[0].mxu0
      %v399 = vadd.f32 0.0, %v398
      %v400 = vpop.f32.mrb[0].mxu0
      %401 = vmatprep.mubr.f32.mxu0 %v288
      %402 = vmatmul.mubr.f32.gmra.mrb[0].mxu0 %v287
      %v403 = vpop.f32.mrb[0].mxu0
      %v404 = vadd.f32 0.0, %v403
      %v405 = vpop.f32.mrb[0].mxu0
      %406 = vmatprep.mubr.f32.mxu0 %v290
      %407 = vmatmul.mubr.f32.gmra.mrb[0].mxu0 %v289
      %v408 = vpop.f32.mrb[0].mxu0
      %v409 = vadd.f32 0.0, %v408
      %v410 = vpop.f32.mrb[0].mxu0
      %411 = vmatprep.mubr.f32.mxu0 %v292
      %412 = vmatmul.mubr.f32.gmra.mrb[0].mxu0 %v291
      %v413 = vpop.f32.mrb[0].mxu0
      %v414 = vadd.f32 0.0, %v413
      %v415 = vpop.f32.mrb[0].mxu0
      %416 = vmatprep.mubr.f32.mxu0 %v294
      %417 = vmatmul.mubr.f32.gmra.mrb[0].mxu0 %v293
      %v418 = vpop.f32.mrb[0].mxu0
      %v419 = vadd.f32 0.0, %v418
      %v420 = vpop.f32.mrb[0].mxu0
      %421 = vmatprep.mubr.f32.mxu0 %v296
      %422 = vmatmul.mubr.f32.gmra.mrb[0].mxu0 %v295
      %v423 = vpop.f32.mrb[0].mxu0
      %v424 = vadd.f32 0.0, %v423
      %v425 = vpop.f32.mrb[0].mxu0
      %426 = vmatprep.mubr.f32.mxu0 %v298
      %427 = vmatmul.mubr.f32.gmra.mrb[0].mxu0 %v297
      %v428 = vpop.f32.mrb[0].mxu0
      %v429 = vadd.f32 0.0, %v428
      %v430 = vpop.f32.mrb[0].mxu0
      %431 = vmatprep.mubr.f32.mxu0 %v300
      %432 = vmatmul.mubr.f32.gmra.mrb[0].mxu0 %v299
      %v433 = vpop.f32.mrb[0].mxu0
      %v434 = vadd.f32 0.0, %v433
      %v435 = vpop.f32.mrb[0].mxu0
      %436 = vmatprep.mubr.f32.mxu0 %v302
      %437 = vmatmul.mubr.f32.gmra.mrb[0].mxu0 %v301
      %v438 = vpop.f32.mrb[0].mxu0
      %v439 = vadd.f32 0.0, %v438
      %v440 = vpop.f32.mrb[0].mxu0
      %441 = vmatprep.mubr.f32.mxu0 %v304
      %442 = vmatmul.mubr.f32.gmra.mrb[0].mxu0 %v303
      %v443 = vpop.f32.mrb[0].mxu0
      %v444 = vadd.f32 0.0, %v443
      %v445 = vpop.f32.mrb[0].mxu0
      %446 = vmatprep.mubr.f32.mxu0 %v306
      %447 = vmatmul.mubr.f32.gmra.mrb[0].mxu0 %v305
      %v448 = vpop.f32.mrb[0].mxu0
      %v449 = vadd.f32 0.0, %v448
      %v450 = vpop.f32.mrb[0].mxu0
      %451 = vdwg.mxu0
      %v452 = vadd.f32 %v259, %v374
      %v453 = vadd.f32 %v260, %v379
      %v454 = vadd.f32 %v261, %v384
      %v455 = vadd.f32 %v262, %v389
      %v456 = vadd.f32 %v263, %v394
      %v457 = vadd.f32 %v264, %v399
      %v458 = vadd.f32 %v265, %v404
      %v459 = vadd.f32 %v266, %v409
      %v460 = vadd.f32 %v267, %v414
      %v461 = vadd.f32 %v268, %v419
      %v462 = vadd.f32 %v269, %v424
      %v463 = vadd.f32 %v270, %v429
      %v464 = vadd.f32 %v271, %v434
      %v465 = vadd.f32 %v272, %v439
      %v466 = vadd.f32 %v273, %v444
      %v467 = vadd.f32 %v274, %v449
      %468 = vst [vmem:[#allocation2] sm:$0xff] %v452
      %469 = vst [vmem:[#allocation2 + $0x8] sm:$0xff] %v453
      %470 = vst [vmem:[#allocation2 + $0x10] sm:$0xff] %v454
      %471 = vst [vmem:[#allocation2 + $0x18] sm:$0xff] %v455
      %472 = vst [vmem:[#allocation2 + $0x20] sm:$0xff] %v456
      %473 = vst [vmem:[#allocation2 + $0x28] sm:$0xff] %v457
      %474 = vst [vmem:[#allocation2 + $0x30] sm:$0xff] %v458
      %475 = vst [vmem:[#allocation2 + $0x38] sm:$0xff] %v459
      %476 = vst [vmem:[#allocation2 + $0x40] sm:$0xff] %v460
      %477 = vst [vmem:[#allocation2 + $0x48] sm:$0xff] %v461
      %478 = vst [vmem:[#allocation2 + $0x50] sm:$0xff] %v462
      %479 = vst [vmem:[#allocation2 + $0x58] sm:$0xff] %v463
      %480 = vst [vmem:[#allocation2 + $0x60] sm:$0xff] %v464
      %481 = vst [vmem:[#allocation2 + $0x68] sm:$0xff] %v465
      %482 = vst [vmem:[#allocation2 + $0x70] sm:$0xff] %v466
      %483 = vst [vmem:[#allocation2 + $0x78] sm:$0xff] %v467
      // Predicated region
      $region37: #{gcn_forward.7} parent=31 // pred_check
        %p484 = pneg %p205
      $region38: #{gcn_forward.7} parent=31 // pred_check_branch
        %486 = sbr.rel (%p484) target = $region40
      $region39: #{gcn_forward.7} parent=31 // pred_region
        %v487 = vld [vmem:[#allocation2] sm:$0xff]
        %v488 = vld [vmem:[#allocation2 + $0x8] sm:$0xff]
        %v489 = vld [vmem:[#allocation2 + $0x10] sm:$0xff]
        %v490 = vld [vmem:[#allocation2 + $0x18] sm:$0xff]
        %v491 = vld [vmem:[#allocation2 + $0x20] sm:$0xff]
        %v492 = vld [vmem:[#allocation2 + $0x28] sm:$0xff]
        %v493 = vld [vmem:[#allocation2 + $0x30] sm:$0xff]
        %v494 = vld [vmem:[#allocation2 + $0x38] sm:$0xff]
        %v495 = vld [vmem:[#allocation2 + $0x40] sm:$0xff]
        %v496 = vld [vmem:[#allocation2 + $0x48] sm:$0xff]
        %v497 = vld [vmem:[#allocation2 + $0x50] sm:$0xff]
        %v498 = vld [vmem:[#allocation2 + $0x58] sm:$0xff]
        %v499 = vld [vmem:[#allocation2 + $0x60] sm:$0xff]
        %v500 = vld [vmem:[#allocation2 + $0x68] sm:$0xff]
        %v501 = vld [vmem:[#allocation2 + $0x70] sm:$0xff]
        %v502 = vld [vmem:[#allocation2 + $0x78] sm:$0xff]
        %v503 = vld [vmem:[%s2] sm:$0x1]
        %v505 = vlaneseq
        %v506 = vshrl.u32 %v505, 7
        %v507 = vsub.s32 0, %v506
        %v508 = vrot.slane %v503, %v507
        %v510 = vadd.f32 %v487, %v508
        %v511 = vadd.f32 %v488, %v508
        %v512 = vadd.f32 %v489, %v508
        %v513 = vadd.f32 %v490, %v508
        %v514 = vadd.f32 %v491, %v508
        %v515 = vadd.f32 %v492, %v508
        %v516 = vadd.f32 %v493, %v508
        %v517 = vadd.f32 %v494, %v508
        %v518 = vadd.f32 %v495, %v508
        %v519 = vadd.f32 %v496, %v508
        %v520 = vadd.f32 %v497, %v508
        %v521 = vadd.f32 %v498, %v508
        %v522 = vadd.f32 %v499, %v508
        %v523 = vadd.f32 %v500, %v508
        %v524 = vadd.f32 %v501, %v508
        %v525 = vadd.f32 %v502, %v508
        %v526 = vlaneseq
        %v527 = vand.u32 %v526, 127
        %vm528 = vcmp.lt.s32.totalorder %v527, 8
        %v529 = vsel %vm528, %v510, -1e+30
        %v530 = vsel %vm528, %v511, -1e+30
        %v531 = vsel %vm528, %v512, -1e+30
        %v532 = vsel %vm528, %v513, -1e+30
        %v533 = vsel %vm528, %v514, -1e+30
        %v534 = vsel %vm528, %v515, -1e+30
        %v535 = vsel %vm528, %v516, -1e+30
        %v536 = vsel %vm528, %v517, -1e+30
        %v537 = vsel %vm528, %v518, -1e+30
        %v538 = vsel %vm528, %v519, -1e+30
        %v539 = vsel %vm528, %v520, -1e+30
        %v540 = vsel %vm528, %v521, -1e+30
        %v541 = vsel %vm528, %v522, -1e+30
        %v542 = vsel %vm528, %v523, -1e+30
        %v543 = vsel %vm528, %v524, -1e+30
        %v544 = vsel %vm528, %v525, -1e+30
        %545 = vmax.xlane.f32.xlu0 %v529
        %v546 = vpop.xlane.xlu0 %545
        %547 = vmax.xlane.f32.xlu0 %v530
        %v548 = vpop.xlane.xlu0 %547
        %549 = vmax.xlane.f32.xlu0 %v531
        %v550 = vpop.xlane.xlu0 %549
        %551 = vmax.xlane.f32.xlu0 %v532
        %v552 = vpop.xlane.xlu0 %551
        %553 = vmax.xlane.f32.xlu0 %v533
        %v554 = vpop.xlane.xlu0 %553
        %555 = vmax.xlane.f32.xlu0 %v534
        %v556 = vpop.xlane.xlu0 %555
        %557 = vmax.xlane.f32.xlu0 %v535
        %v558 = vpop.xlane.xlu0 %557
        %559 = vmax.xlane.f32.xlu0 %v536
        %v560 = vpop.xlane.xlu0 %559
        %561 = vmax.xlane.f32.xlu0 %v537
        %v562 = vpop.xlane.xlu0 %561
        %563 = vmax.xlane.f32.xlu0 %v538
        %v564 = vpop.xlane.xlu0 %563
        %565 = vmax.xlane.f32.xlu0 %v539
        %v566 = vpop.xlane.xlu0 %565
        %567 = vmax.xlane.f32.xlu0 %v540
        %v568 = vpop.xlane.xlu0 %567
        %569 = vmax.xlane.f32.xlu0 %v541
        %v570 = vpop.xlane.xlu0 %569
        %571 = vmax.xlane.f32.xlu0 %v542
        %v572 = vpop.xlane.xlu0 %571
        %573 = vmax.xlane.f32.xlu0 %v543
        %v574 = vpop.xlane.xlu0 %573
        %575 = vmax.xlane.f32.xlu0 %v544
        %v576 = vpop.xlane.xlu0 %575
        %v577 = vsub.f32 %v529, %v546
        %v578 = vsub.f32 %v530, %v548
        %v579 = vsub.f32 %v531, %v550
        %v580 = vsub.f32 %v532, %v552
        %v581 = vsub.f32 %v533, %v554
        %v582 = vsub.f32 %v534, %v556
        %v583 = vsub.f32 %v535, %v558
        %v584 = vsub.f32 %v536, %v560
        %v585 = vsub.f32 %v537, %v562
        %v586 = vsub.f32 %v538, %v564
        %v587 = vsub.f32 %v539, %v566
        %v588 = vsub.f32 %v540, %v568
        %v589 = vsub.f32 %v541, %v570
        %v590 = vsub.f32 %v542, %v572
        %v591 = vsub.f32 %v543, %v574
        %v592 = vsub.f32 %v544, %v576
        %v593 = vmul.f32 %v577, 1.442695
        %v594 = vpow.pop %v593
        %v595 = vmul.f32 %v578, 1.442695
        %v596 = vpow.pop %v595
        %v597 = vmul.f32 %v579, 1.442695
        %v598 = vpow.pop %v597
        %v599 = vmul.f32 %v580, 1.442695
        %v600 = vpow.pop %v599
        %v601 = vmul.f32 %v581, 1.442695
        %v602 = vpow.pop %v601
        %v603 = vmul.f32 %v582, 1.442695
        %v604 = vpow.pop %v603
        %v605 = vmul.f32 %v583, 1.442695
        %v606 = vpow.pop %v605
        %v607 = vmul.f32 %v584, 1.442695
        %v608 = vpow.pop %v607
        %v609 = vmul.f32 %v585, 1.442695
        %v610 = vpow.pop %v609
        %v611 = vmul.f32 %v586, 1.442695
        %v612 = vpow.pop %v611
        %v613 = vmul.f32 %v587, 1.442695
        %v614 = vpow.pop %v613
        %v615 = vmul.f32 %v588, 1.442695
        %v616 = vpow.pop %v615
        %v617 = vmul.f32 %v589, 1.442695
        %v618 = vpow.pop %v617
        %v619 = vmul.f32 %v590, 1.442695
        %v620 = vpow.pop %v619
        %v621 = vmul.f32 %v591, 1.442695
        %v622 = vpow.pop %v621
        %v623 = vmul.f32 %v592, 1.442695
        %v624 = vpow.pop %v623
        %625 = vadd.xlane.f32.xlu0 %v594
        %v626 = vpop.xlane.xlu0 %625
        %627 = vadd.xlane.f32.xlu0 %v596
        %v628 = vpop.xlane.xlu0 %627
        %629 = vadd.xlane.f32.xlu0 %v598
        %v630 = vpop.xlane.xlu0 %629
        %631 = vadd.xlane.f32.xlu0 %v600
        %v632 = vpop.xlane.xlu0 %631
        %633 = vadd.xlane.f32.xlu0 %v602
        %v634 = vpop.xlane.xlu0 %633
        %635 = vadd.xlane.f32.xlu0 %v604
        %v636 = vpop.xlane.xlu0 %635
        %637 = vadd.xlane.f32.xlu0 %v606
        %v638 = vpop.xlane.xlu0 %637
        %639 = vadd.xlane.f32.xlu0 %v608
        %v640 = vpop.xlane.xlu0 %639
        %641 = vadd.xlane.f32.xlu0 %v610
        %v642 = vpop.xlane.xlu0 %641
        %643 = vadd.xlane.f32.xlu0 %v612
        %v644 = vpop.xlane.xlu0 %643
        %645 = vadd.xlane.f32.xlu0 %v614
        %v646 = vpop.xlane.xlu0 %645
        %647 = vadd.xlane.f32.xlu0 %v616
        %v648 = vpop.xlane.xlu0 %647
        %649 = vadd.xlane.f32.xlu0 %v618
        %v650 = vpop.xlane.xlu0 %649
        %651 = vadd.xlane.f32.xlu0 %v620
        %v652 = vpop.xlane.xlu0 %651
        %653 = vadd.xlane.f32.xlu0 %v622
        %v654 = vpop.xlane.xlu0 %653
        %655 = vadd.xlane.f32.xlu0 %v624
        %v656 = vpop.xlane.xlu0 %655
        %v657 = vlog2.pop %v626
        %v658 = vmul.f32 %v657, 0.6931472
        %v659 = vlog2.pop %v628
        %v660 = vmul.f32 %v659, 0.6931472
        %v661 = vlog2.pop %v630
        %v662 = vmul.f32 %v661, 0.6931472
        %v663 = vlog2.pop %v632
        %v664 = vmul.f32 %v663, 0.6931472
        %v665 = vlog2.pop %v634
        %v666 = vmul.f32 %v665, 0.6931472
        %v667 = vlog2.pop %v636
        %v668 = vmul.f32 %v667, 0.6931472
        %v669 = vlog2.pop %v638
        %v670 = vmul.f32 %v669, 0.6931472
        %v671 = vlog2.pop %v640
        %v672 = vmul.f32 %v671, 0.6931472
        %v673 = vlog2.pop %v642
        %v674 = vmul.f32 %v673, 0.6931472
        %v675 = vlog2.pop %v644
        %v676 = vmul.f32 %v675, 0.6931472
        %v677 = vlog2.pop %v646
        %v678 = vmul.f32 %v677, 0.6931472
        %v679 = vlog2.pop %v648
        %v680 = vmul.f32 %v679, 0.6931472
        %v681 = vlog2.pop %v650
        %v682 = vmul.f32 %v681, 0.6931472
        %v683 = vlog2.pop %v652
        %v684 = vmul.f32 %v683, 0.6931472
        %v685 = vlog2.pop %v654
        %v686 = vmul.f32 %v685, 0.6931472
        %v687 = vlog2.pop %v656
        %v688 = vmul.f32 %v687, 0.6931472
        %v689 = vsub.f32 %v577, %v658
        %v690 = vsub.f32 %v578, %v660
        %v691 = vsub.f32 %v579, %v662
        %v692 = vsub.f32 %v580, %v664
        %v693 = vsub.f32 %v581, %v666
        %v694 = vsub.f32 %v582, %v668
        %v695 = vsub.f32 %v583, %v670
        %v696 = vsub.f32 %v584, %v672
        %v697 = vsub.f32 %v585, %v674
        %v698 = vsub.f32 %v586, %v676
        %v699 = vsub.f32 %v587, %v678
        %v700 = vsub.f32 %v588, %v680
        %v701 = vsub.f32 %v589, %v682
        %v702 = vsub.f32 %v590, %v684
        %v703 = vsub.f32 %v591, %v686
        %v704 = vsub.f32 %v592, %v688
        %705 = vst [vmem:[%s203] sm:$0xff] %v689
        %706 = vst [vmem:[%s203 + $0x8] sm:$0xff] %v690
        %707 = vst [vmem:[%s203 + $0x10] sm:$0xff] %v691
        %708 = vst [vmem:[%s203 + $0x18] sm:$0xff] %v692
        %709 = vst [vmem:[%s203 + $0x20] sm:$0xff] %v693
        %710 = vst [vmem:[%s203 + $0x28] sm:$0xff] %v694
        %711 = vst [vmem:[%s203 + $0x30] sm:$0xff] %v695
        %712 = vst [vmem:[%s203 + $0x38] sm:$0xff] %v696
        %713 = vst [vmem:[%s203 + $0x40] sm:$0xff] %v697
        %714 = vst [vmem:[%s203 + $0x48] sm:$0xff] %v698
        %715 = vst [vmem:[%s203 + $0x50] sm:$0xff] %v699
        %716 = vst [vmem:[%s203 + $0x58] sm:$0xff] %v700
        %717 = vst [vmem:[%s203 + $0x60] sm:$0xff] %v701
        %718 = vst [vmem:[%s203 + $0x68] sm:$0xff] %v702
        %719 = vst [vmem:[%s203 + $0x70] sm:$0xff] %v703
        %720 = vst [vmem:[%s203 + $0x78] sm:$0xff] %v704
      $region40: #{gcn_forward.7} parent=31 // pred_fallthru
        _
      %s721 = smul.u32 16, %s18
      %p722 = scmp.lt.s32.totalorder %s721, 31
      %s723 = scalar_select %p722, %s721, 31
      %s724 = smul.addr %s723, 8
      %s725 = scalar_lea.vmem %s3, %s724
      // Predicated region
      $region41: #{gcn_forward.7} parent=31 // pred_check
        %p726 = pneg %p114
      $region42: #{gcn_forward.7} parent=31 // pred_check_branch
        %728 = sbr.rel (%p726) target = $region44
      $region43: #{gcn_forward.7} parent=31 // pred_region
        %s729 = smul.u32 16, %s18
      $region44: #{gcn_forward.7} parent=31 // pred_fallthru
        _
    $region32: #{gcn_forward.7} parent=5 // pred_fallthru
      _
    %p730 = scmp.le.s32.totalorder 2, %s9
    // Predicated region
    $region45: #{gcn_forward.7} parent=5 // pred_check
      %p731 = pneg %p730
    $region46: #{gcn_forward.7} parent=5 // pred_check_branch
      %733 = sbr.rel (%p731) target = $region48
    $region47: #{gcn_forward.7} parent=5 // pred_region
      %s734 = ssub.s32 %s9, 2
      // Predicated region
      $region49: #{gcn_forward.7} parent=47 // pred_check
        %p735 = pneg %p120
      $region50: #{gcn_forward.7} parent=47 // pred_check_branch
        %737 = sbr.rel (%p735) target = $region52
      $region51: #{gcn_forward.7} parent=47 // pred_region
        %s738 = smul.u32 16, %s20
        %p739 = scmp.lt.s32.totalorder %s738, 31
        %s740 = scalar_select %p739, %s738, 31
        %s741 = smul.addr %s740, 8
        %s742 = scalar_lea.vmem %s3, %s741
      $region52: #{gcn_forward.7} parent=47 // pred_fallthru
        _
    $region48: #{gcn_forward.7} parent=5 // pred_fallthru
      _
  $region6: #{gcn_forward.7} parent=0 // loop_footer
    %s13 = sadd.s32 1, %s9
  $region7: #{gcn_forward.7} parent=0 // loop_footer_branch
    %8 = sbr.rel target = $region3
  $region8: #{gcn_forward.7} parent=0 // loop_exit
    _

</llo_original>
